<compile_context>
chip_gen: v7x
topology: tpu7x:2x2x1
jax: 0.10.0
libtpu: 0.0.40
codegen_flags: <defaults>
</compile_context>

<pallas_src>
import random

import jax
import jax.numpy as jnp
from jax.experimental import pallas as pl
from jax.experimental.pallas import tpu as pltpu

# bf16 is the TPU MXU's native operand format (f32 operands force multi-pass
# decomposition).  Accumulation stays f32.  Set to jnp.float32 for a tighter
# match against the pure-f32 reference.
RECURRENT_MATMUL_DTYPE = jnp.bfloat16


# ----------------------------- Pallas kernel ------------------------------

def seq2seq_kernel(tf_ref,      # VMEM (T_out, 1, 1) f32  teacher-forcing mask (0/1)
                   x_ref,       # VMEM (T_in,  B, 1) f32  encoder inputs (time-major)
                   tgt_ref,     # VMEM (T_out, B, 1) f32  targets        (time-major)
                   whh_e_ref,   # VMEM (Hp, 4Hp) bf16     encoder W_hh^T, gate-padded
                   whh_d_ref,   # VMEM (Hp, 4Hp) bf16     decoder W_hh^T, gate-padded
                   small_ref,   # VMEM (8, 4Hp)  f32      packed small f32 operands
                   out_ref,     # VMEM (T_out*B, 1) f32   outputs, row-major (t, b)
                   ):
    T_in, B = x_ref.shape[0], x_ref.shape[1]
    T_out = tgt_ref.shape[0]
    Hp = whh_e_ref.shape[0]

    x = x_ref[...]            # (T_in, B, 1)
    tgt = tgt_ref[...]        # (T_out, B, 1)
    tf = tf_ref[...]          # (T_out, 1, 1)
    whh_e = whh_e_ref[...]
    whh_d = whh_d_ref[...]
    small = small_ref[...]

    # Packed small-operand slab (one DMA); all slices are loop-invariant and
    # hoisted here, before the serial h/c chain.
    wih_e = small[0:1, :]         # (1, 4Hp)  encoder W_ih^T (input_size == 1)
    b_e = small[1:2, :]           # (1, 4Hp)  encoder b_ih + b_hh
    wih_d = small[2:3, :]         # (1, 4Hp)  decoder W_ih^T
    b_d = small[3:4, :]           # (1, 4Hp)  decoder b_ih + b_hh
    wlin = small[4:5, :Hp]        # (1, Hp)   output Linear weight (padded lanes are 0)
    blin = small[5:6, 0:1]        # (1, 1)    output Linear bias

    mxu_dtype = whh_e.dtype       # bf16 (or f32 if RECURRENT_MATMUL_DTYPE is f32)

    # Hoisted, vectorized input contributions (biases folded in) — computed
    # once, off the serial h/c dependence chain.
    x_c_all = x * wih_e + b_e                 # (T_in,  B, 4Hp)
    tgt_c_all = tgt * wih_d + b_d             # (T_out, B, 4Hp)
    x0_c = x[T_in - 1] * wih_d + b_d          # (B, 4Hp) first decoder input = last enc input
    tf_tgt = tf * tgt_c_all                   # pre-multiplied teacher-forced contribution
    omt = 1.0 - tf                            # (T_out, 1, 1)

    def act(gates):
        # Gate slices are full 128-lane blocks (H padded to Hp): no sub-vreg
        # lane extracts on the critical path.  Gate order (PyTorch): i, f, g, o.
        i = jax.nn.sigmoid(gates[:, 0 * Hp:1 * Hp])
        f = jax.nn.sigmoid(gates[:, 1 * Hp:2 * Hp])
        g = jnp.tanh(gates[:, 2 * Hp:3 * Hp])
        o = jax.nn.sigmoid(gates[:, 3 * Hp:4 * Hp])
        return i, f, g, o

    # ------------------------------ Encoder ------------------------------
    # t == 0 special case: h == c == 0, so no recurrent matmul and no f*c term.
    i, f, g, o = act(x_c_all[0])
    c = i * g
    h = o * jnp.tanh(c)

    # Remaining steps, fully unrolled: one bf16 MXU push + full-vreg VPU/EUP
    # work per step.
    for t in range(1, T_in):
        gates = x_c_all[t] + jnp.dot(h.astype(mxu_dtype), whh_e,
                                     preferred_element_type=jnp.float32)
        i, f, g, o = act(gates)
        c = f * c + i * g
        h = o * jnp.tanh(c)

    # ------------------------------ Decoder ------------------------------
    # Per step: one 128x512 bf16 MXU push (recurrent term) + a VPU/XLU lane
    # reduce for the output head.  The value fed back on free-running steps is
    # exactly the emitted f32 output (PyTorch semantics).
    outs = []
    for t in range(T_out):
        if t == 0:
            x_c = x0_c
        else:
            xfree = outs[-1] * wih_d + b_d                 # out_{t-1} * W_ih^T + b_d
            x_c = tf_tgt[t - 1] + omt[t - 1] * xfree       # tf is 0/1 -> exact select
        gates = x_c + jnp.dot(h.astype(mxu_dtype), whh_d,
                              preferred_element_type=jnp.float32)
        i, f, g, o = act(gates)
        c = f * c + i * g
        h = o * jnp.tanh(c)
        # Output Linear head: VPU broadcast-multiply + XLU lane reduce, f32.
        out_t = jnp.sum(h * wlin, axis=-1, keepdims=True) + blin   # (B, 1)
        outs.append(out_t)

    # Single store of the whole (T_out*B, 1) output slab.
    out_ref[...] = jnp.concatenate(outs, axis=0)


# ------------------------------- Wrapper -----------------------------------

def _pad_gate_mat(w_t, H, Hp):
    """(H, 4H) -> (Hp, 4Hp): each of the 4 gate blocks padded to Hp lanes."""
    w = w_t.reshape(H, 4, H)
    w = jnp.pad(w, ((0, Hp - H), (0, 0), (0, Hp - H)))
    return w.reshape(Hp, 4 * Hp)


def _pad_gate_vec(v, H, Hp):
    """(4H,) -> (4Hp,)"""
    v = v.reshape(4, H)
    v = jnp.pad(v, ((0, 0), (0, Hp - H)))
    return v.reshape(4 * Hp)


def lstm_encoder_decoder_forward(inputs, targets, target_len,
                                 teacher_forcing_ratio, params, seed=0):
    """inputs: (B, T_in, 1), targets: (B, target_len, 1) -> ((B, target_len, 1), tf_mask)."""
    B, T_in, I = inputs.shape
    assert I == 1, "module semantics require input_size == 1"
    H = params["whh_e"].shape[1]
    Hp = max(128, ((H + 127) // 128) * 128)   # pad hidden dim to full lane width
    G = 4 * Hp

    # Host-side teacher-forcing draws (replaces random.random() in PyTorch).
    rng = random.Random(seed)
    tf_mask = jnp.asarray(
        [1 if rng.random() < teacher_forcing_ratio else 0 for _ in range(target_len)],
        dtype=jnp.int32)

    f32 = jnp.float32
    # Layout glue (plain JAX): time-major inputs, gate-aligned padded weights.
    x_tm = jnp.transpose(inputs, (1, 0, 2)).astype(f32)       # (T_in,  B, 1)
    tgt_tm = jnp.transpose(targets, (1, 0, 2)).astype(f32)    # (T_out, B, 1)
    tf_f32 = tf_mask.astype(f32).reshape(target_len, 1, 1)    # mask as f32 (off the scalar path)

    wih_e = _pad_gate_vec(params["wih_e"][:, 0].astype(f32), H, Hp)            # (4Hp,)
    b_e = _pad_gate_vec((params["bih_e"] + params["bhh_e"]).astype(f32), H, Hp)
    whh_e = _pad_gate_mat(params["whh_e"].T.astype(f32), H, Hp)                # (Hp, 4Hp)

    wih_d = _pad_gate_vec(params["wih_d"][:, 0].astype(f32), H, Hp)
    b_d = _pad_gate_vec((params["bih_d"] + params["bhh_d"]).astype(f32), H, Hp)
    whh_d = _pad_gate_mat(params["whh_d"].T.astype(f32), H, Hp)                # (Hp, 4Hp)

    wlin = jnp.pad(params["wlin"].reshape(H).astype(f32), (0, Hp - H))         # (Hp,)
    blin_s = params["blin"].reshape(()).astype(f32)

    # One packed slab for all small f32 operands -> one prologue DMA.
    small = jnp.zeros((8, G), f32)
    small = small.at[0].set(wih_e)
    small = small.at[1].set(b_e)
    small = small.at[2].set(wih_d)
    small = small.at[3].set(b_d)
    small = small.at[4, :Hp].set(wlin)
    small = small.at[5].set(jnp.full((G,), blin_s, f32))

    mxu_dt = RECURRENT_MATMUL_DTYPE
    whh_e = whh_e.astype(mxu_dt)
    whh_d = whh_d.astype(mxu_dt)

    vmem = pl.BlockSpec(memory_space=pltpu.MemorySpace.VMEM)

    out_flat = pl.pallas_call(
        seq2seq_kernel,
        out_shape=jax.ShapeDtypeStruct((target_len * B, 1), jnp.float32),
        in_specs=[vmem] * 6,
        out_specs=vmem,
    )(tf_f32, x_tm, tgt_tm, whh_e, whh_d, small)

    outputs = out_flat.reshape(target_len, B).T[:, :, None]    # (B, T_out, 1)
    return outputs, tf_mask


# -------------------------- Pure-JAX reference ------------------------------

def reference_forward(inputs, targets, tf_mask, params):
    B, T_in, I = inputs.shape
    H = params["whh_e"].shape[1]
    target_len = targets.shape[1]

    def cell(x, h, c, wih, whh, bih, bhh):
        gates = x @ wih.T + bih + h @ whh.T + bhh
        i = jax.nn.sigmoid(gates[:, 0 * H:1 * H])
        f = jax.nn.sigmoid(gates[:, 1 * H:2 * H])
        g = jnp.tanh(gates[:, 2 * H:3 * H])
        o = jax.nn.sigmoid(gates[:, 3 * H:4 * H])
        c = f * c + i * g
        h = o * jnp.tanh(c)
        return h, c

    h = jnp.zeros((B, H), jnp.float32)
    c = jnp.zeros((B, H), jnp.float32)
    for t in range(T_in):
        h, c = cell(inputs[:, t, :], h, c,
                    params["wih_e"], params["whh_e"],
                    params["bih_e"], params["bhh_e"])

    dec_in = inputs[:, -1, :]
    outs = []
    for t in range(target_len):
        h, c = cell(dec_in, h, c,
                    params["wih_d"], params["whh_d"],
                    params["bih_d"], params["bhh_d"])
        out = h @ params["wlin"].T + params["blin"]       # (B, 1)
        outs.append(out)
        dec_in = jnp.where(tf_mask[t] == 1, targets[:, t, :], out)
    return jnp.stack(outs, axis=1)                        # (B, target_len, 1)


# --------------------------------- Main -------------------------------------

def init_params(key, input_size, hidden_size):
    H, I = hidden_size, input_size
    k = 1.0 / jnp.sqrt(jnp.float32(H))
    keys = jax.random.split(key, 10)
    u = lambda kk, shape: jax.random.uniform(kk, shape, jnp.float32, -k, k)
    return {
        # encoder LSTM
        "wih_e": u(keys[0], (4 * H, I)),
        "whh_e": u(keys[1], (4 * H, H)),
        "bih_e": u(keys[2], (4 * H,)),
        "bhh_e": u(keys[3], (4 * H,)),
        # decoder LSTM
        "wih_d": u(keys[4], (4 * H, I)),
        "whh_d": u(keys[5], (4 * H, H)),
        "bih_d": u(keys[6], (4 * H,)),
        "bhh_d": u(keys[7], (4 * H,)),
        # decoder Linear(hidden_size -> input_size)
        "wlin": u(keys[8], (I, H)),
        "blin": u(keys[9], (I,)),
    }


if __name__ == "__main__":
    B, T_in, target_len = 2, 8, 4
    input_size, hidden_size = 1, 32
    teacher_forcing_ratio = 0.5

    key = jax.random.PRNGKey(0)
    k_par, k_in, k_tgt = jax.random.split(key, 3)

    params = init_params(k_par, input_size, hidden_size)
    inputs = jax.random.normal(k_in, (B, T_in, input_size), jnp.float32)
    targets = jax.random.normal(k_tgt, (B, target_len, input_size), jnp.float32)

    outputs, tf_mask = lstm_encoder_decoder_forward(
        inputs, targets, target_len, teacher_forcing_ratio, params, seed=0)
    outputs = jax.block_until_ready(outputs)

    ref = reference_forward(inputs, targets, tf_mask, params)
    # bf16 recurrent-matmul operands (f32 accumulation, f32 output head and
    # feedback) loosen exact agreement with the pure-f32 reference slightly.
    if RECURRENT_MATMUL_DTYPE == jnp.bfloat16:
        atol = rtol = 2e-2
    else:
        atol = rtol = 1e-3
    err = jnp.max(jnp.abs(outputs - ref))
    assert outputs.shape == (B, target_len, input_size)
    assert jnp.allclose(outputs, ref, atol=atol, rtol=rtol), f"max abs err {err}"
    print("KERNEL_OK")
</pallas_src>

<mosaic_0001>
module attributes {stable_mosaic.version = 11 : i64} {
  func.func @seq2seq_kernel(%arg0: memref<4x1x1xf32, #tpu.memory_space<vmem>>, %arg1: memref<8x2x1xf32, #tpu.memory_space<vmem>>, %arg2: memref<4x2x1xf32, #tpu.memory_space<vmem>>, %arg3: memref<128x512xbf16, #tpu.memory_space<vmem>>, %arg4: memref<128x512xbf16, #tpu.memory_space<vmem>>, %arg5: memref<8x512xf32, #tpu.memory_space<vmem>>, %arg6: memref<8x1xf32, #tpu.memory_space<vmem>>) attributes {dimension_semantics = [], scalar_prefetch = 0 : i64, scratch_operands = 0 : i64, tpu.core_type = #tpu.core_type<tc>} {
    %c0 = arith.constant 0 : index
    %c0_0 = arith.constant 0 : index
    %c0_1 = arith.constant 0 : index
    %0 = vector.load %arg1[%c0, %c0_0, %c0_1] : memref<8x2x1xf32, #tpu.memory_space<vmem>>, vector<8x2x1xf32>
    %c0_2 = arith.constant 0 : index
    %c0_3 = arith.constant 0 : index
    %c0_4 = arith.constant 0 : index
    %1 = vector.load %arg2[%c0_2, %c0_3, %c0_4] : memref<4x2x1xf32, #tpu.memory_space<vmem>>, vector<4x2x1xf32>
    %c0_5 = arith.constant 0 : index
    %c0_6 = arith.constant 0 : index
    %c0_7 = arith.constant 0 : index
    %2 = vector.load %arg0[%c0_5, %c0_6, %c0_7] : memref<4x1x1xf32, #tpu.memory_space<vmem>>, vector<4x1x1xf32>
    %c0_8 = arith.constant 0 : index
    %c0_9 = arith.constant 0 : index
    %3 = vector.load %arg3[%c0_8, %c0_9] : memref<128x512xbf16, #tpu.memory_space<vmem>>, vector<128x512xbf16>
    %c0_10 = arith.constant 0 : index
    %c0_11 = arith.constant 0 : index
    %4 = vector.load %arg4[%c0_10, %c0_11] : memref<128x512xbf16, #tpu.memory_space<vmem>>, vector<128x512xbf16>
    %c0_12 = arith.constant 0 : index
    %c0_13 = arith.constant 0 : index
    %5 = vector.load %arg5[%c0_12, %c0_13] : memref<8x512xf32, #tpu.memory_space<vmem>>, vector<8x512xf32>
    %6 = vector.extract_strided_slice %5 {offsets = [0, 0], sizes = [1, 512], strides = [1, 1]} : vector<8x512xf32> to vector<1x512xf32>
    %7 = vector.extract_strided_slice %5 {offsets = [1, 0], sizes = [1, 512], strides = [1, 1]} : vector<8x512xf32> to vector<1x512xf32>
    %8 = vector.extract_strided_slice %5 {offsets = [2, 0], sizes = [1, 512], strides = [1, 1]} : vector<8x512xf32> to vector<1x512xf32>
    %9 = vector.extract_strided_slice %5 {offsets = [3, 0], sizes = [1, 512], strides = [1, 1]} : vector<8x512xf32> to vector<1x512xf32>
    %10 = vector.extract_strided_slice %5 {offsets = [4, 0], sizes = [1, 128], strides = [1, 1]} : vector<8x512xf32> to vector<1x128xf32>
    %11 = vector.extract_strided_slice %5 {offsets = [5, 0], sizes = [1, 1], strides = [1, 1]} : vector<8x512xf32> to vector<1x1xf32>
    %12 = vector.shape_cast %6 : vector<1x512xf32> to vector<1x1x512xf32>
    %13 = vector.broadcast %0 : vector<8x2x1xf32> to vector<8x2x512xf32>
    %14 = vector.broadcast %12 : vector<1x1x512xf32> to vector<8x2x512xf32>
    %15 = arith.mulf %13, %14 : vector<8x2x512xf32>
    %16 = vector.shape_cast %7 : vector<1x512xf32> to vector<1x1x512xf32>
    %17 = vector.broadcast %16 : vector<1x1x512xf32> to vector<8x2x512xf32>
    %18 = arith.addf %15, %17 : vector<8x2x512xf32>
    %19 = vector.shape_cast %8 : vector<1x512xf32> to vector<1x1x512xf32>
    %20 = vector.broadcast %1 : vector<4x2x1xf32> to vector<4x2x512xf32>
    %21 = vector.broadcast %19 : vector<1x1x512xf32> to vector<4x2x512xf32>
    %22 = arith.mulf %20, %21 : vector<4x2x512xf32>
    %23 = vector.shape_cast %9 : vector<1x512xf32> to vector<1x1x512xf32>
    %24 = vector.broadcast %23 : vector<1x1x512xf32> to vector<4x2x512xf32>
    %25 = arith.addf %22, %24 : vector<4x2x512xf32>
    %26 = vector.extract_strided_slice %0 {offsets = [7, 0, 0], sizes = [1, 2, 1], strides = [1, 1, 1]} : vector<8x2x1xf32> to vector<1x2x1xf32>
    %27 = vector.shape_cast %26 : vector<1x2x1xf32> to vector<2x1xf32>
    %28 = vector.broadcast %27 : vector<2x1xf32> to vector<2x512xf32>
    %29 = vector.broadcast %8 : vector<1x512xf32> to vector<2x512xf32>
    %30 = arith.mulf %28, %29 : vector<2x512xf32>
    %31 = vector.broadcast %9 : vector<1x512xf32> to vector<2x512xf32>
    %32 = arith.addf %30, %31 : vector<2x512xf32>
    %33 = vector.broadcast %2 : vector<4x1x1xf32> to vector<4x2x512xf32>
    %34 = arith.mulf %33, %25 : vector<4x2x512xf32>
    %cst = arith.constant 1.000000e+00 : f32
    %35 = vector.broadcast %cst : f32 to vector<4x1x1xf32>
    %36 = arith.subf %35, %2 : vector<4x1x1xf32>
    %37 = vector.extract_strided_slice %18 {offsets = [0, 0, 0], sizes = [1, 2, 512], strides = [1, 1, 1]} : vector<8x2x512xf32> to vector<1x2x512xf32>
    %38 = vector.shape_cast %37 : vector<1x2x512xf32> to vector<2x512xf32>
    %39 = vector.extract_strided_slice %38 {offsets = [0, 0], sizes = [2, 128], strides = [1, 1]} : vector<2x512xf32> to vector<2x128xf32>
    %40 = arith.negf %39 : vector<2x128xf32>
    %41 = math.exp %40 : vector<2x128xf32>
    %cst_14 = arith.constant 1.000000e+00 : f32
    %42 = vector.broadcast %cst_14 : f32 to vector<2x128xf32>
    %43 = arith.addf %42, %41 : vector<2x128xf32>
    %44 = arith.divf %42, %43 : vector<2x128xf32>
    %45 = vector.extract_strided_slice %38 {offsets = [0, 256], sizes = [2, 128], strides = [1, 1]} : vector<2x512xf32> to vector<2x128xf32>
    %46 = math.tanh %45 : vector<2x128xf32>
    %47 = vector.extract_strided_slice %38 {offsets = [0, 384], sizes = [2, 128], strides = [1, 1]} : vector<2x512xf32> to vector<2x128xf32>
    %48 = arith.negf %47 : vector<2x128xf32>
    %49 = math.exp %48 : vector<2x128xf32>
    %cst_15 = arith.constant 1.000000e+00 : f32
    %50 = vector.broadcast %cst_15 : f32 to vector<2x128xf32>
    %51 = arith.addf %50, %49 : vector<2x128xf32>
    %52 = arith.divf %50, %51 : vector<2x128xf32>
    %53 = arith.mulf %44, %46 : vector<2x128xf32>
    %54 = math.tanh %53 : vector<2x128xf32>
    %55 = arith.mulf %52, %54 : vector<2x128xf32>
    %56 = vector.extract_strided_slice %18 {offsets = [1, 0, 0], sizes = [1, 2, 512], strides = [1, 1, 1]} : vector<8x2x512xf32> to vector<1x2x512xf32>
    %57 = vector.shape_cast %56 : vector<1x2x512xf32> to vector<2x512xf32>
    %58 = arith.truncf %55 : vector<2x128xf32> to vector<2x128xbf16>
    %cst_16 = arith.constant dense<0.000000e+00> : vector<2x512xf32>
    %59 = tpu.matmul %58, %3, %cst_16 {dimension_numbers = #tpu.dot_dimension_numbers<[1], [0], [0], [1], [0, 0, 1, 1], [], []>} : vector<2x128xbf16>, vector<128x512xbf16>, vector<2x512xf32> -> vector<2x512xf32>
    %60 = arith.addf %57, %59 : vector<2x512xf32>
    %61 = vector.extract_strided_slice %60 {offsets = [0, 0], sizes = [2, 128], strides = [1, 1]} : vector<2x512xf32> to vector<2x128xf32>
    %62 = arith.negf %61 : vector<2x128xf32>
    %63 = math.exp %62 : vector<2x128xf32>
    %cst_17 = arith.constant 1.000000e+00 : f32
    %64 = vector.broadcast %cst_17 : f32 to vector<2x128xf32>
    %65 = arith.addf %64, %63 : vector<2x128xf32>
    %66 = arith.divf %64, %65 : vector<2x128xf32>
    %67 = vector.extract_strided_slice %60 {offsets = [0, 128], sizes = [2, 128], strides = [1, 1]} : vector<2x512xf32> to vector<2x128xf32>
    %68 = arith.negf %67 : vector<2x128xf32>
    %69 = math.exp %68 : vector<2x128xf32>
    %cst_18 = arith.constant 1.000000e+00 : f32
    %70 = vector.broadcast %cst_18 : f32 to vector<2x128xf32>
    %71 = arith.addf %70, %69 : vector<2x128xf32>
    %72 = arith.divf %70, %71 : vector<2x128xf32>
    %73 = vector.extract_strided_slice %60 {offsets = [0, 256], sizes = [2, 128], strides = [1, 1]} : vector<2x512xf32> to vector<2x128xf32>
    %74 = math.tanh %73 : vector<2x128xf32>
    %75 = vector.extract_strided_slice %60 {offsets = [0, 384], sizes = [2, 128], strides = [1, 1]} : vector<2x512xf32> to vector<2x128xf32>
    %76 = arith.negf %75 : vector<2x128xf32>
    %77 = math.exp %76 : vector<2x128xf32>
    %cst_19 = arith.constant 1.000000e+00 : f32
    %78 = vector.broadcast %cst_19 : f32 to vector<2x128xf32>
    %79 = arith.addf %78, %77 : vector<2x128xf32>
    %80 = arith.divf %78, %79 : vector<2x128xf32>
    %81 = arith.mulf %72, %53 : vector<2x128xf32>
    %82 = arith.mulf %66, %74 : vector<2x128xf32>
    %83 = arith.addf %81, %82 : vector<2x128xf32>
    %84 = math.tanh %83 : vector<2x128xf32>
    %85 = arith.mulf %80, %84 : vector<2x128xf32>
    %86 = vector.extract_strided_slice %18 {offsets = [2, 0, 0], sizes = [1, 2, 512], strides = [1, 1, 1]} : vector<8x2x512xf32> to vector<1x2x512xf32>
    %87 = vector.shape_cast %86 : vector<1x2x512xf32> to vector<2x512xf32>
    %88 = arith.truncf %85 : vector<2x128xf32> to vector<2x128xbf16>
    %cst_20 = arith.constant dense<0.000000e+00> : vector<2x512xf32>
    %89 = tpu.matmul %88, %3, %cst_20 {dimension_numbers = #tpu.dot_dimension_numbers<[1], [0], [0], [1], [0, 0, 1, 1], [], []>} : vector<2x128xbf16>, vector<128x512xbf16>, vector<2x512xf32> -> vector<2x512xf32>
    %90 = arith.addf %87, %89 : vector<2x512xf32>
    %91 = vector.extract_strided_slice %90 {offsets = [0, 0], sizes = [2, 128], strides = [1, 1]} : vector<2x512xf32> to vector<2x128xf32>
    %92 = arith.negf %91 : vector<2x128xf32>
    %93 = math.exp %92 : vector<2x128xf32>
    %cst_21 = arith.constant 1.000000e+00 : f32
    %94 = vector.broadcast %cst_21 : f32 to vector<2x128xf32>
    %95 = arith.addf %94, %93 : vector<2x128xf32>
    %96 = arith.divf %94, %95 : vector<2x128xf32>
    %97 = vector.extract_strided_slice %90 {offsets = [0, 128], sizes = [2, 128], strides = [1, 1]} : vector<2x512xf32> to vector<2x128xf32>
    %98 = arith.negf %97 : vector<2x128xf32>
    %99 = math.exp %98 : vector<2x128xf32>
    %cst_22 = arith.constant 1.000000e+00 : f32
    %100 = vector.broadcast %cst_22 : f32 to vector<2x128xf32>
    %101 = arith.addf %100, %99 : vector<2x128xf32>
    %102 = arith.divf %100, %101 : vector<2x128xf32>
    %103 = vector.extract_strided_slice %90 {offsets = [0, 256], sizes = [2, 128], strides = [1, 1]} : vector<2x512xf32> to vector<2x128xf32>
    %104 = math.tanh %103 : vector<2x128xf32>
    %105 = vector.extract_strided_slice %90 {offsets = [0, 384], sizes = [2, 128], strides = [1, 1]} : vector<2x512xf32> to vector<2x128xf32>
    %106 = arith.negf %105 : vector<2x128xf32>
    %107 = math.exp %106 : vector<2x128xf32>
    %cst_23 = arith.constant 1.000000e+00 : f32
    %108 = vector.broadcast %cst_23 : f32 to vector<2x128xf32>
    %109 = arith.addf %108, %107 : vector<2x128xf32>
    %110 = arith.divf %108, %109 : vector<2x128xf32>
    %111 = arith.mulf %102, %83 : vector<2x128xf32>
    %112 = arith.mulf %96, %104 : vector<2x128xf32>
    %113 = arith.addf %111, %112 : vector<2x128xf32>
    %114 = math.tanh %113 : vector<2x128xf32>
    %115 = arith.mulf %110, %114 : vector<2x128xf32>
    %116 = vector.extract_strided_slice %18 {offsets = [3, 0, 0], sizes = [1, 2, 512], strides = [1, 1, 1]} : vector<8x2x512xf32> to vector<1x2x512xf32>
    %117 = vector.shape_cast %116 : vector<1x2x512xf32> to vector<2x512xf32>
    %118 = arith.truncf %115 : vector<2x128xf32> to vector<2x128xbf16>
    %cst_24 = arith.constant dense<0.000000e+00> : vector<2x512xf32>
    %119 = tpu.matmul %118, %3, %cst_24 {dimension_numbers = #tpu.dot_dimension_numbers<[1], [0], [0], [1], [0, 0, 1, 1], [], []>} : vector<2x128xbf16>, vector<128x512xbf16>, vector<2x512xf32> -> vector<2x512xf32>
    %120 = arith.addf %117, %119 : vector<2x512xf32>
    %121 = vector.extract_strided_slice %120 {offsets = [0, 0], sizes = [2, 128], strides = [1, 1]} : vector<2x512xf32> to vector<2x128xf32>
    %122 = arith.negf %121 : vector<2x128xf32>
    %123 = math.exp %122 : vector<2x128xf32>
    %cst_25 = arith.constant 1.000000e+00 : f32
    %124 = vector.broadcast %cst_25 : f32 to vector<2x128xf32>
    %125 = arith.addf %124, %123 : vector<2x128xf32>
    %126 = arith.divf %124, %125 : vector<2x128xf32>
    %127 = vector.extract_strided_slice %120 {offsets = [0, 128], sizes = [2, 128], strides = [1, 1]} : vector<2x512xf32> to vector<2x128xf32>
    %128 = arith.negf %127 : vector<2x128xf32>
    %129 = math.exp %128 : vector<2x128xf32>
    %cst_26 = arith.constant 1.000000e+00 : f32
    %130 = vector.broadcast %cst_26 : f32 to vector<2x128xf32>
    %131 = arith.addf %130, %129 : vector<2x128xf32>
    %132 = arith.divf %130, %131 : vector<2x128xf32>
    %133 = vector.extract_strided_slice %120 {offsets = [0, 256], sizes = [2, 128], strides = [1, 1]} : vector<2x512xf32> to vector<2x128xf32>
    %134 = math.tanh %133 : vector<2x128xf32>
    %135 = vector.extract_strided_slice %120 {offsets = [0, 384], sizes = [2, 128], strides = [1, 1]} : vector<2x512xf32> to vector<2x128xf32>
    %136 = arith.negf %135 : vector<2x128xf32>
    %137 = math.exp %136 : vector<2x128xf32>
    %cst_27 = arith.constant 1.000000e+00 : f32
    %138 = vector.broadcast %cst_27 : f32 to vector<2x128xf32>
    %139 = arith.addf %138, %137 : vector<2x128xf32>
    %140 = arith.divf %138, %139 : vector<2x128xf32>
    %141 = arith.mulf %132, %113 : vector<2x128xf32>
    %142 = arith.mulf %126, %134 : vector<2x128xf32>
    %143 = arith.addf %141, %142 : vector<2x128xf32>
    %144 = math.tanh %143 : vector<2x128xf32>
    %145 = arith.mulf %140, %144 : vector<2x128xf32>
    %146 = vector.extract_strided_slice %18 {offsets = [4, 0, 0], sizes = [1, 2, 512], strides = [1, 1, 1]} : vector<8x2x512xf32> to vector<1x2x512xf32>
    %147 = vector.shape_cast %146 : vector<1x2x512xf32> to vector<2x512xf32>
    %148 = arith.truncf %145 : vector<2x128xf32> to vector<2x128xbf16>
    %cst_28 = arith.constant dense<0.000000e+00> : vector<2x512xf32>
    %149 = tpu.matmul %148, %3, %cst_28 {dimension_numbers = #tpu.dot_dimension_numbers<[1], [0], [0], [1], [0, 0, 1, 1], [], []>} : vector<2x128xbf16>, vector<128x512xbf16>, vector<2x512xf32> -> vector<2x512xf32>
    %150 = arith.addf %147, %149 : vector<2x512xf32>
    %151 = vector.extract_strided_slice %150 {offsets = [0, 0], sizes = [2, 128], strides = [1, 1]} : vector<2x512xf32> to vector<2x128xf32>
    %152 = arith.negf %151 : vector<2x128xf32>
    %153 = math.exp %152 : vector<2x128xf32>
    %cst_29 = arith.constant 1.000000e+00 : f32
    %154 = vector.broadcast %cst_29 : f32 to vector<2x128xf32>
    %155 = arith.addf %154, %153 : vector<2x128xf32>
    %156 = arith.divf %154, %155 : vector<2x128xf32>
    %157 = vector.extract_strided_slice %150 {offsets = [0, 128], sizes = [2, 128], strides = [1, 1]} : vector<2x512xf32> to vector<2x128xf32>
    %158 = arith.negf %157 : vector<2x128xf32>
    %159 = math.exp %158 : vector<2x128xf32>
    %cst_30 = arith.constant 1.000000e+00 : f32
    %160 = vector.broadcast %cst_30 : f32 to vector<2x128xf32>
    %161 = arith.addf %160, %159 : vector<2x128xf32>
    %162 = arith.divf %160, %161 : vector<2x128xf32>
    %163 = vector.extract_strided_slice %150 {offsets = [0, 256], sizes = [2, 128], strides = [1, 1]} : vector<2x512xf32> to vector<2x128xf32>
    %164 = math.tanh %163 : vector<2x128xf32>
    %165 = vector.extract_strided_slice %150 {offsets = [0, 384], sizes = [2, 128], strides = [1, 1]} : vector<2x512xf32> to vector<2x128xf32>
    %166 = arith.negf %165 : vector<2x128xf32>
    %167 = math.exp %166 : vector<2x128xf32>
    %cst_31 = arith.constant 1.000000e+00 : f32
    %168 = vector.broadcast %cst_31 : f32 to vector<2x128xf32>
    %169 = arith.addf %168, %167 : vector<2x128xf32>
    %170 = arith.divf %168, %169 : vector<2x128xf32>
    %171 = arith.mulf %162, %143 : vector<2x128xf32>
    %172 = arith.mulf %156, %164 : vector<2x128xf32>
    %173 = arith.addf %171, %172 : vector<2x128xf32>
    %174 = math.tanh %173 : vector<2x128xf32>
    %175 = arith.mulf %170, %174 : vector<2x128xf32>
    %176 = vector.extract_strided_slice %18 {offsets = [5, 0, 0], sizes = [1, 2, 512], strides = [1, 1, 1]} : vector<8x2x512xf32> to vector<1x2x512xf32>
    %177 = vector.shape_cast %176 : vector<1x2x512xf32> to vector<2x512xf32>
    %178 = arith.truncf %175 : vector<2x128xf32> to vector<2x128xbf16>
    %cst_32 = arith.constant dense<0.000000e+00> : vector<2x512xf32>
    %179 = tpu.matmul %178, %3, %cst_32 {dimension_numbers = #tpu.dot_dimension_numbers<[1], [0], [0], [1], [0, 0, 1, 1], [], []>} : vector<2x128xbf16>, vector<128x512xbf16>, vector<2x512xf32> -> vector<2x512xf32>
    %180 = arith.addf %177, %179 : vector<2x512xf32>
    %181 = vector.extract_strided_slice %180 {offsets = [0, 0], sizes = [2, 128], strides = [1, 1]} : vector<2x512xf32> to vector<2x128xf32>
    %182 = arith.negf %181 : vector<2x128xf32>
    %183 = math.exp %182 : vector<2x128xf32>
    %cst_33 = arith.constant 1.000000e+00 : f32
    %184 = vector.broadcast %cst_33 : f32 to vector<2x128xf32>
    %185 = arith.addf %184, %183 : vector<2x128xf32>
    %186 = arith.divf %184, %185 : vector<2x128xf32>
    %187 = vector.extract_strided_slice %180 {offsets = [0, 128], sizes = [2, 128], strides = [1, 1]} : vector<2x512xf32> to vector<2x128xf32>
    %188 = arith.negf %187 : vector<2x128xf32>
    %189 = math.exp %188 : vector<2x128xf32>
    %cst_34 = arith.constant 1.000000e+00 : f32
    %190 = vector.broadcast %cst_34 : f32 to vector<2x128xf32>
    %191 = arith.addf %190, %189 : vector<2x128xf32>
    %192 = arith.divf %190, %191 : vector<2x128xf32>
    %193 = vector.extract_strided_slice %180 {offsets = [0, 256], sizes = [2, 128], strides = [1, 1]} : vector<2x512xf32> to vector<2x128xf32>
    %194 = math.tanh %193 : vector<2x128xf32>
    %195 = vector.extract_strided_slice %180 {offsets = [0, 384], sizes = [2, 128], strides = [1, 1]} : vector<2x512xf32> to vector<2x128xf32>
    %196 = arith.negf %195 : vector<2x128xf32>
    %197 = math.exp %196 : vector<2x128xf32>
    %cst_35 = arith.constant 1.000000e+00 : f32
    %198 = vector.broadcast %cst_35 : f32 to vector<2x128xf32>
    %199 = arith.addf %198, %197 : vector<2x128xf32>
    %200 = arith.divf %198, %199 : vector<2x128xf32>
    %201 = arith.mulf %192, %173 : vector<2x128xf32>
    %202 = arith.mulf %186, %194 : vector<2x128xf32>
    %203 = arith.addf %201, %202 : vector<2x128xf32>
    %204 = math.tanh %203 : vector<2x128xf32>
    %205 = arith.mulf %200, %204 : vector<2x128xf32>
    %206 = vector.extract_strided_slice %18 {offsets = [6, 0, 0], sizes = [1, 2, 512], strides = [1, 1, 1]} : vector<8x2x512xf32> to vector<1x2x512xf32>
    %207 = vector.shape_cast %206 : vector<1x2x512xf32> to vector<2x512xf32>
    %208 = arith.truncf %205 : vector<2x128xf32> to vector<2x128xbf16>
    %cst_36 = arith.constant dense<0.000000e+00> : vector<2x512xf32>
    %209 = tpu.matmul %208, %3, %cst_36 {dimension_numbers = #tpu.dot_dimension_numbers<[1], [0], [0], [1], [0, 0, 1, 1], [], []>} : vector<2x128xbf16>, vector<128x512xbf16>, vector<2x512xf32> -> vector<2x512xf32>
    %210 = arith.addf %207, %209 : vector<2x512xf32>
    %211 = vector.extract_strided_slice %210 {offsets = [0, 0], sizes = [2, 128], strides = [1, 1]} : vector<2x512xf32> to vector<2x128xf32>
    %212 = arith.negf %211 : vector<2x128xf32>
    %213 = math.exp %212 : vector<2x128xf32>
    %cst_37 = arith.constant 1.000000e+00 : f32
    %214 = vector.broadcast %cst_37 : f32 to vector<2x128xf32>
    %215 = arith.addf %214, %213 : vector<2x128xf32>
    %216 = arith.divf %214, %215 : vector<2x128xf32>
    %217 = vector.extract_strided_slice %210 {offsets = [0, 128], sizes = [2, 128], strides = [1, 1]} : vector<2x512xf32> to vector<2x128xf32>
    %218 = arith.negf %217 : vector<2x128xf32>
    %219 = math.exp %218 : vector<2x128xf32>
    %cst_38 = arith.constant 1.000000e+00 : f32
    %220 = vector.broadcast %cst_38 : f32 to vector<2x128xf32>
    %221 = arith.addf %220, %219 : vector<2x128xf32>
    %222 = arith.divf %220, %221 : vector<2x128xf32>
    %223 = vector.extract_strided_slice %210 {offsets = [0, 256], sizes = [2, 128], strides = [1, 1]} : vector<2x512xf32> to vector<2x128xf32>
    %224 = math.tanh %223 : vector<2x128xf32>
    %225 = vector.extract_strided_slice %210 {offsets = [0, 384], sizes = [2, 128], strides = [1, 1]} : vector<2x512xf32> to vector<2x128xf32>
    %226 = arith.negf %225 : vector<2x128xf32>
    %227 = math.exp %226 : vector<2x128xf32>
    %cst_39 = arith.constant 1.000000e+00 : f32
    %228 = vector.broadcast %cst_39 : f32 to vector<2x128xf32>
    %229 = arith.addf %228, %227 : vector<2x128xf32>
    %230 = arith.divf %228, %229 : vector<2x128xf32>
    %231 = arith.mulf %222, %203 : vector<2x128xf32>
    %232 = arith.mulf %216, %224 : vector<2x128xf32>
    %233 = arith.addf %231, %232 : vector<2x128xf32>
    %234 = math.tanh %233 : vector<2x128xf32>
    %235 = arith.mulf %230, %234 : vector<2x128xf32>
    %236 = vector.extract_strided_slice %18 {offsets = [7, 0, 0], sizes = [1, 2, 512], strides = [1, 1, 1]} : vector<8x2x512xf32> to vector<1x2x512xf32>
    %237 = vector.shape_cast %236 : vector<1x2x512xf32> to vector<2x512xf32>
    %238 = arith.truncf %235 : vector<2x128xf32> to vector<2x128xbf16>
    %cst_40 = arith.constant dense<0.000000e+00> : vector<2x512xf32>
    %239 = tpu.matmul %238, %3, %cst_40 {dimension_numbers = #tpu.dot_dimension_numbers<[1], [0], [0], [1], [0, 0, 1, 1], [], []>} : vector<2x128xbf16>, vector<128x512xbf16>, vector<2x512xf32> -> vector<2x512xf32>
    %240 = arith.addf %237, %239 : vector<2x512xf32>
    %241 = vector.extract_strided_slice %240 {offsets = [0, 0], sizes = [2, 128], strides = [1, 1]} : vector<2x512xf32> to vector<2x128xf32>
    %242 = arith.negf %241 : vector<2x128xf32>
    %243 = math.exp %242 : vector<2x128xf32>
    %cst_41 = arith.constant 1.000000e+00 : f32
    %244 = vector.broadcast %cst_41 : f32 to vector<2x128xf32>
    %245 = arith.addf %244, %243 : vector<2x128xf32>
    %246 = arith.divf %244, %245 : vector<2x128xf32>
    %247 = vector.extract_strided_slice %240 {offsets = [0, 128], sizes = [2, 128], strides = [1, 1]} : vector<2x512xf32> to vector<2x128xf32>
    %248 = arith.negf %247 : vector<2x128xf32>
    %249 = math.exp %248 : vector<2x128xf32>
    %cst_42 = arith.constant 1.000000e+00 : f32
    %250 = vector.broadcast %cst_42 : f32 to vector<2x128xf32>
    %251 = arith.addf %250, %249 : vector<2x128xf32>
    %252 = arith.divf %250, %251 : vector<2x128xf32>
    %253 = vector.extract_strided_slice %240 {offsets = [0, 256], sizes = [2, 128], strides = [1, 1]} : vector<2x512xf32> to vector<2x128xf32>
    %254 = math.tanh %253 : vector<2x128xf32>
    %255 = vector.extract_strided_slice %240 {offsets = [0, 384], sizes = [2, 128], strides = [1, 1]} : vector<2x512xf32> to vector<2x128xf32>
    %256 = arith.negf %255 : vector<2x128xf32>
    %257 = math.exp %256 : vector<2x128xf32>
    %cst_43 = arith.constant 1.000000e+00 : f32
    %258 = vector.broadcast %cst_43 : f32 to vector<2x128xf32>
    %259 = arith.addf %258, %257 : vector<2x128xf32>
    %260 = arith.divf %258, %259 : vector<2x128xf32>
    %261 = arith.mulf %252, %233 : vector<2x128xf32>
    %262 = arith.mulf %246, %254 : vector<2x128xf32>
    %263 = arith.addf %261, %262 : vector<2x128xf32>
    %264 = math.tanh %263 : vector<2x128xf32>
    %265 = arith.mulf %260, %264 : vector<2x128xf32>
    %266 = arith.truncf %265 : vector<2x128xf32> to vector<2x128xbf16>
    %cst_44 = arith.constant dense<0.000000e+00> : vector<2x512xf32>
    %267 = tpu.matmul %266, %4, %cst_44 {dimension_numbers = #tpu.dot_dimension_numbers<[1], [0], [0], [1], [0, 0, 1, 1], [], []>} : vector<2x128xbf16>, vector<128x512xbf16>, vector<2x512xf32> -> vector<2x512xf32>
    %268 = arith.addf %32, %267 : vector<2x512xf32>
    %269 = vector.extract_strided_slice %268 {offsets = [0, 0], sizes = [2, 128], strides = [1, 1]} : vector<2x512xf32> to vector<2x128xf32>
    %270 = arith.negf %269 : vector<2x128xf32>
    %271 = math.exp %270 : vector<2x128xf32>
    %cst_45 = arith.constant 1.000000e+00 : f32
    %272 = vector.broadcast %cst_45 : f32 to vector<2x128xf32>
    %273 = arith.addf %272, %271 : vector<2x128xf32>
    %274 = arith.divf %272, %273 : vector<2x128xf32>
    %275 = vector.extract_strided_slice %268 {offsets = [0, 128], sizes = [2, 128], strides = [1, 1]} : vector<2x512xf32> to vector<2x128xf32>
    %276 = arith.negf %275 : vector<2x128xf32>
    %277 = math.exp %276 : vector<2x128xf32>
    %cst_46 = arith.constant 1.000000e+00 : f32
    %278 = vector.broadcast %cst_46 : f32 to vector<2x128xf32>
    %279 = arith.addf %278, %277 : vector<2x128xf32>
    %280 = arith.divf %278, %279 : vector<2x128xf32>
    %281 = vector.extract_strided_slice %268 {offsets = [0, 256], sizes = [2, 128], strides = [1, 1]} : vector<2x512xf32> to vector<2x128xf32>
    %282 = math.tanh %281 : vector<2x128xf32>
    %283 = vector.extract_strided_slice %268 {offsets = [0, 384], sizes = [2, 128], strides = [1, 1]} : vector<2x512xf32> to vector<2x128xf32>
    %284 = arith.negf %283 : vector<2x128xf32>
    %285 = math.exp %284 : vector<2x128xf32>
    %cst_47 = arith.constant 1.000000e+00 : f32
    %286 = vector.broadcast %cst_47 : f32 to vector<2x128xf32>
    %287 = arith.addf %286, %285 : vector<2x128xf32>
    %288 = arith.divf %286, %287 : vector<2x128xf32>
    %289 = arith.mulf %280, %263 : vector<2x128xf32>
    %290 = arith.mulf %274, %282 : vector<2x128xf32>
    %291 = arith.addf %289, %290 : vector<2x128xf32>
    %292 = math.tanh %291 : vector<2x128xf32>
    %293 = arith.mulf %288, %292 : vector<2x128xf32>
    %294 = vector.broadcast %10 : vector<1x128xf32> to vector<2x128xf32>
    %295 = arith.mulf %293, %294 : vector<2x128xf32>
    %cst_48 = arith.constant dense<0.000000e+00> : vector<2xf32>
    %296 = vector.multi_reduction <add>, %295, %cst_48 [1] : vector<2x128xf32> to vector<2xf32>
    %297 = vector.shape_cast %296 : vector<2xf32> to vector<2x1xf32>
    %298 = vector.broadcast %11 : vector<1x1xf32> to vector<2x1xf32>
    %299 = arith.addf %297, %298 : vector<2x1xf32>
    %300 = vector.broadcast %299 : vector<2x1xf32> to vector<2x512xf32>
    %301 = vector.broadcast %8 : vector<1x512xf32> to vector<2x512xf32>
    %302 = arith.mulf %300, %301 : vector<2x512xf32>
    %303 = vector.broadcast %9 : vector<1x512xf32> to vector<2x512xf32>
    %304 = arith.addf %302, %303 : vector<2x512xf32>
    %305 = vector.extract_strided_slice %34 {offsets = [0, 0, 0], sizes = [1, 2, 512], strides = [1, 1, 1]} : vector<4x2x512xf32> to vector<1x2x512xf32>
    %306 = vector.shape_cast %305 : vector<1x2x512xf32> to vector<2x512xf32>
    %307 = vector.extract_strided_slice %36 {offsets = [0, 0, 0], sizes = [1, 1, 1], strides = [1, 1, 1]} : vector<4x1x1xf32> to vector<1x1x1xf32>
    %308 = vector.shape_cast %307 : vector<1x1x1xf32> to vector<1x1xf32>
    %309 = vector.broadcast %308 : vector<1x1xf32> to vector<2x512xf32>
    %310 = arith.mulf %309, %304 : vector<2x512xf32>
    %311 = arith.addf %306, %310 : vector<2x512xf32>
    %312 = arith.truncf %293 : vector<2x128xf32> to vector<2x128xbf16>
    %cst_49 = arith.constant dense<0.000000e+00> : vector<2x512xf32>
    %313 = tpu.matmul %312, %4, %cst_49 {dimension_numbers = #tpu.dot_dimension_numbers<[1], [0], [0], [1], [0, 0, 1, 1], [], []>} : vector<2x128xbf16>, vector<128x512xbf16>, vector<2x512xf32> -> vector<2x512xf32>
    %314 = arith.addf %311, %313 : vector<2x512xf32>
    %315 = vector.extract_strided_slice %314 {offsets = [0, 0], sizes = [2, 128], strides = [1, 1]} : vector<2x512xf32> to vector<2x128xf32>
    %316 = arith.negf %315 : vector<2x128xf32>
    %317 = math.exp %316 : vector<2x128xf32>
    %cst_50 = arith.constant 1.000000e+00 : f32
    %318 = vector.broadcast %cst_50 : f32 to vector<2x128xf32>
    %319 = arith.addf %318, %317 : vector<2x128xf32>
    %320 = arith.divf %318, %319 : vector<2x128xf32>
    %321 = vector.extract_strided_slice %314 {offsets = [0, 128], sizes = [2, 128], strides = [1, 1]} : vector<2x512xf32> to vector<2x128xf32>
    %322 = arith.negf %321 : vector<2x128xf32>
    %323 = math.exp %322 : vector<2x128xf32>
    %cst_51 = arith.constant 1.000000e+00 : f32
    %324 = vector.broadcast %cst_51 : f32 to vector<2x128xf32>
    %325 = arith.addf %324, %323 : vector<2x128xf32>
    %326 = arith.divf %324, %325 : vector<2x128xf32>
    %327 = vector.extract_strided_slice %314 {offsets = [0, 256], sizes = [2, 128], strides = [1, 1]} : vector<2x512xf32> to vector<2x128xf32>
    %328 = math.tanh %327 : vector<2x128xf32>
    %329 = vector.extract_strided_slice %314 {offsets = [0, 384], sizes = [2, 128], strides = [1, 1]} : vector<2x512xf32> to vector<2x128xf32>
    %330 = arith.negf %329 : vector<2x128xf32>
    %331 = math.exp %330 : vector<2x128xf32>
    %cst_52 = arith.constant 1.000000e+00 : f32
    %332 = vector.broadcast %cst_52 : f32 to vector<2x128xf32>
    %333 = arith.addf %332, %331 : vector<2x128xf32>
    %334 = arith.divf %332, %333 : vector<2x128xf32>
    %335 = arith.mulf %326, %291 : vector<2x128xf32>
    %336 = arith.mulf %320, %328 : vector<2x128xf32>
    %337 = arith.addf %335, %336 : vector<2x128xf32>
    %338 = math.tanh %337 : vector<2x128xf32>
    %339 = arith.mulf %334, %338 : vector<2x128xf32>
    %340 = vector.broadcast %10 : vector<1x128xf32> to vector<2x128xf32>
    %341 = arith.mulf %339, %340 : vector<2x128xf32>
    %cst_53 = arith.constant dense<0.000000e+00> : vector<2xf32>
    %342 = vector.multi_reduction <add>, %341, %cst_53 [1] : vector<2x128xf32> to vector<2xf32>
    %343 = vector.shape_cast %342 : vector<2xf32> to vector<2x1xf32>
    %344 = vector.broadcast %11 : vector<1x1xf32> to vector<2x1xf32>
    %345 = arith.addf %343, %344 : vector<2x1xf32>
    %346 = vector.broadcast %345 : vector<2x1xf32> to vector<2x512xf32>
    %347 = vector.broadcast %8 : vector<1x512xf32> to vector<2x512xf32>
    %348 = arith.mulf %346, %347 : vector<2x512xf32>
    %349 = vector.broadcast %9 : vector<1x512xf32> to vector<2x512xf32>
    %350 = arith.addf %348, %349 : vector<2x512xf32>
    %351 = vector.extract_strided_slice %34 {offsets = [1, 0, 0], sizes = [1, 2, 512], strides = [1, 1, 1]} : vector<4x2x512xf32> to vector<1x2x512xf32>
    %352 = vector.shape_cast %351 : vector<1x2x512xf32> to vector<2x512xf32>
    %353 = vector.extract_strided_slice %36 {offsets = [1, 0, 0], sizes = [1, 1, 1], strides = [1, 1, 1]} : vector<4x1x1xf32> to vector<1x1x1xf32>
    %354 = vector.shape_cast %353 : vector<1x1x1xf32> to vector<1x1xf32>
    %355 = vector.broadcast %354 : vector<1x1xf32> to vector<2x512xf32>
    %356 = arith.mulf %355, %350 : vector<2x512xf32>
    %357 = arith.addf %352, %356 : vector<2x512xf32>
    %358 = arith.truncf %339 : vector<2x128xf32> to vector<2x128xbf16>
    %cst_54 = arith.constant dense<0.000000e+00> : vector<2x512xf32>
    %359 = tpu.matmul %358, %4, %cst_54 {dimension_numbers = #tpu.dot_dimension_numbers<[1], [0], [0], [1], [0, 0, 1, 1], [], []>} : vector<2x128xbf16>, vector<128x512xbf16>, vector<2x512xf32> -> vector<2x512xf32>
    %360 = arith.addf %357, %359 : vector<2x512xf32>
    %361 = vector.extract_strided_slice %360 {offsets = [0, 0], sizes = [2, 128], strides = [1, 1]} : vector<2x512xf32> to vector<2x128xf32>
    %362 = arith.negf %361 : vector<2x128xf32>
    %363 = math.exp %362 : vector<2x128xf32>
    %cst_55 = arith.constant 1.000000e+00 : f32
    %364 = vector.broadcast %cst_55 : f32 to vector<2x128xf32>
    %365 = arith.addf %364, %363 : vector<2x128xf32>
    %366 = arith.divf %364, %365 : vector<2x128xf32>
    %367 = vector.extract_strided_slice %360 {offsets = [0, 128], sizes = [2, 128], strides = [1, 1]} : vector<2x512xf32> to vector<2x128xf32>
    %368 = arith.negf %367 : vector<2x128xf32>
    %369 = math.exp %368 : vector<2x128xf32>
    %cst_56 = arith.constant 1.000000e+00 : f32
    %370 = vector.broadcast %cst_56 : f32 to vector<2x128xf32>
    %371 = arith.addf %370, %369 : vector<2x128xf32>
    %372 = arith.divf %370, %371 : vector<2x128xf32>
    %373 = vector.extract_strided_slice %360 {offsets = [0, 256], sizes = [2, 128], strides = [1, 1]} : vector<2x512xf32> to vector<2x128xf32>
    %374 = math.tanh %373 : vector<2x128xf32>
    %375 = vector.extract_strided_slice %360 {offsets = [0, 384], sizes = [2, 128], strides = [1, 1]} : vector<2x512xf32> to vector<2x128xf32>
    %376 = arith.negf %375 : vector<2x128xf32>
    %377 = math.exp %376 : vector<2x128xf32>
    %cst_57 = arith.constant 1.000000e+00 : f32
    %378 = vector.broadcast %cst_57 : f32 to vector<2x128xf32>
    %379 = arith.addf %378, %377 : vector<2x128xf32>
    %380 = arith.divf %378, %379 : vector<2x128xf32>
    %381 = arith.mulf %372, %337 : vector<2x128xf32>
    %382 = arith.mulf %366, %374 : vector<2x128xf32>
    %383 = arith.addf %381, %382 : vector<2x128xf32>
    %384 = math.tanh %383 : vector<2x128xf32>
    %385 = arith.mulf %380, %384 : vector<2x128xf32>
    %386 = vector.broadcast %10 : vector<1x128xf32> to vector<2x128xf32>
    %387 = arith.mulf %385, %386 : vector<2x128xf32>
    %cst_58 = arith.constant dense<0.000000e+00> : vector<2xf32>
    %388 = vector.multi_reduction <add>, %387, %cst_58 [1] : vector<2x128xf32> to vector<2xf32>
    %389 = vector.shape_cast %388 : vector<2xf32> to vector<2x1xf32>
    %390 = vector.broadcast %11 : vector<1x1xf32> to vector<2x1xf32>
    %391 = arith.addf %389, %390 : vector<2x1xf32>
    %392 = vector.broadcast %391 : vector<2x1xf32> to vector<2x512xf32>
    %393 = vector.broadcast %8 : vector<1x512xf32> to vector<2x512xf32>
    %394 = arith.mulf %392, %393 : vector<2x512xf32>
    %395 = vector.broadcast %9 : vector<1x512xf32> to vector<2x512xf32>
    %396 = arith.addf %394, %395 : vector<2x512xf32>
    %397 = vector.extract_strided_slice %34 {offsets = [2, 0, 0], sizes = [1, 2, 512], strides = [1, 1, 1]} : vector<4x2x512xf32> to vector<1x2x512xf32>
    %398 = vector.shape_cast %397 : vector<1x2x512xf32> to vector<2x512xf32>
    %399 = vector.extract_strided_slice %36 {offsets = [2, 0, 0], sizes = [1, 1, 1], strides = [1, 1, 1]} : vector<4x1x1xf32> to vector<1x1x1xf32>
    %400 = vector.shape_cast %399 : vector<1x1x1xf32> to vector<1x1xf32>
    %401 = vector.broadcast %400 : vector<1x1xf32> to vector<2x512xf32>
    %402 = arith.mulf %401, %396 : vector<2x512xf32>
    %403 = arith.addf %398, %402 : vector<2x512xf32>
    %404 = arith.truncf %385 : vector<2x128xf32> to vector<2x128xbf16>
    %cst_59 = arith.constant dense<0.000000e+00> : vector<2x512xf32>
    %405 = tpu.matmul %404, %4, %cst_59 {dimension_numbers = #tpu.dot_dimension_numbers<[1], [0], [0], [1], [0, 0, 1, 1], [], []>} : vector<2x128xbf16>, vector<128x512xbf16>, vector<2x512xf32> -> vector<2x512xf32>
    %406 = arith.addf %403, %405 : vector<2x512xf32>
    %407 = vector.extract_strided_slice %406 {offsets = [0, 0], sizes = [2, 128], strides = [1, 1]} : vector<2x512xf32> to vector<2x128xf32>
    %408 = arith.negf %407 : vector<2x128xf32>
    %409 = math.exp %408 : vector<2x128xf32>
    %cst_60 = arith.constant 1.000000e+00 : f32
    %410 = vector.broadcast %cst_60 : f32 to vector<2x128xf32>
    %411 = arith.addf %410, %409 : vector<2x128xf32>
    %412 = arith.divf %410, %411 : vector<2x128xf32>
    %413 = vector.extract_strided_slice %406 {offsets = [0, 128], sizes = [2, 128], strides = [1, 1]} : vector<2x512xf32> to vector<2x128xf32>
    %414 = arith.negf %413 : vector<2x128xf32>
    %415 = math.exp %414 : vector<2x128xf32>
    %cst_61 = arith.constant 1.000000e+00 : f32
    %416 = vector.broadcast %cst_61 : f32 to vector<2x128xf32>
    %417 = arith.addf %416, %415 : vector<2x128xf32>
    %418 = arith.divf %416, %417 : vector<2x128xf32>
    %419 = vector.extract_strided_slice %406 {offsets = [0, 256], sizes = [2, 128], strides = [1, 1]} : vector<2x512xf32> to vector<2x128xf32>
    %420 = math.tanh %419 : vector<2x128xf32>
    %421 = vector.extract_strided_slice %406 {offsets = [0, 384], sizes = [2, 128], strides = [1, 1]} : vector<2x512xf32> to vector<2x128xf32>
    %422 = arith.negf %421 : vector<2x128xf32>
    %423 = math.exp %422 : vector<2x128xf32>
    %cst_62 = arith.constant 1.000000e+00 : f32
    %424 = vector.broadcast %cst_62 : f32 to vector<2x128xf32>
    %425 = arith.addf %424, %423 : vector<2x128xf32>
    %426 = arith.divf %424, %425 : vector<2x128xf32>
    %427 = arith.mulf %418, %383 : vector<2x128xf32>
    %428 = arith.mulf %412, %420 : vector<2x128xf32>
    %429 = arith.addf %427, %428 : vector<2x128xf32>
    %430 = math.tanh %429 : vector<2x128xf32>
    %431 = arith.mulf %426, %430 : vector<2x128xf32>
    %432 = vector.broadcast %10 : vector<1x128xf32> to vector<2x128xf32>
    %433 = arith.mulf %431, %432 : vector<2x128xf32>
    %cst_63 = arith.constant dense<0.000000e+00> : vector<2xf32>
    %434 = vector.multi_reduction <add>, %433, %cst_63 [1] : vector<2x128xf32> to vector<2xf32>
    %435 = vector.shape_cast %434 : vector<2xf32> to vector<2x1xf32>
    %436 = vector.broadcast %11 : vector<1x1xf32> to vector<2x1xf32>
    %437 = arith.addf %435, %436 : vector<2x1xf32>
    %438 = tpu.concatenate %299, %345, %391, %437 in 0 : vector<2x1xf32>, vector<2x1xf32>, vector<2x1xf32>, vector<2x1xf32> -> vector<8x1xf32>
    %c0_64 = arith.constant 0 : index
    %c0_65 = arith.constant 0 : index
    %439 = vector.load %arg6[%c0_64, %c0_65] : memref<8x1xf32, #tpu.memory_space<vmem>>, vector<8x1xf32>
    tpu.vector_store %arg6[%c0_64, %c0_65], %438 {strides = array<i32>} : memref<8x1xf32, #tpu.memory_space<vmem>>, vector<8x1xf32>,
    return
  }
}

</mosaic_0001>

<llo_original>
// kernel: tpu_custom_call.1
$region0: #{tpu_custom_call.1}
  #allocation0 [shape = 'u32[]', space=smem, size = 0x4, offset = 0x4, fixed_abs, tag = 'smem constant byte address 0x4 - core index']
  #allocation1 [shape = 'u32[144,128]{1,0:T(1,128)}', space=vmem, size = 0x12000, scoped, tag = 'internal scratch']
  %s0 = inlined_call_operand.vmem [shape: f32[4,1,1], index: 0, kind: input, shape index: {}]
  %s1 = inlined_call_operand.vmem [shape: f32[8,2,1], index: 1, kind: input, shape index: {}]
  %s2 = inlined_call_operand.vmem [shape: f32[4,2,1], index: 2, kind: input, shape index: {}]
  %s3 = inlined_call_operand.hbm [shape: bf16[128,512], index: 3, kind: input, shape index: {}]
  %s4 = inlined_call_operand.hbm [shape: bf16[128,512], index: 4, kind: input, shape index: {}]
  %s5 = inlined_call_operand.vmem [shape: f32[8,512], index: 5, kind: input, shape index: {}]
  %s6 = inlined_call_operand.vmem [shape: f32[8,1], index: 6, kind: output, shape index: {}]
  %s7 = sld [smem:[#allocation0]]
  $region42: #{tpu_custom_call.1} parent=0
    _
  %s9 = ssub.s32 1, %s7
  %s10 = scalar_select 0, %s9, %s7
  $region1: #{tpu_custom_call.1} parent=0
    #allocation2 [shape = 'u8[131072]{0}', space=vmem, size = 0x20000, scoped, tag = 'input window, operand 3, single buffered']
    #allocation3 [shape = 's32[1]{0}', space=sflag, size = 0x4, scoped, tag = 'scoped memory for tpu_custom_call.1']
    #allocation4 [shape = 'u8[131072]{0}', space=vmem, size = 0x20000, scoped, tag = 'input window, operand 4, single buffered']
    #allocation5 [shape = 's32[1]{0}', space=sflag, size = 0x4, scoped, tag = 'scoped memory for tpu_custom_call.1']
    %11 = vsyncpa [#allocation3], 0
    %12 = vsyncpa [#allocation5], 0
    // Predicated region
    $region2: #{tpu_custom_call.1} parent=1 // pred_check
      _
    $region3: #{tpu_custom_call.1} parent=1 // pred_check_branch
      %14 = sbr.rel (0) target = $region5
    $region4: #{tpu_custom_call.1} parent=1 // pred_region
      _
    $region5: #{tpu_custom_call.1} parent=1 // pred_fallthru
      _
    // Predicated region
    $region6: #{tpu_custom_call.1} parent=1 // pred_check
      _
    $region7: #{tpu_custom_call.1} parent=1 // pred_check_branch
      %16 = sbr.rel (0) target = $region9
    $region8: #{tpu_custom_call.1} parent=1 // pred_region
      _
    $region9: #{tpu_custom_call.1} parent=1 // pred_fallthru
      _
    // Predicated region
    $region10: #{tpu_custom_call.1} parent=1 // pred_check
      _
    $region11: #{tpu_custom_call.1} parent=1 // pred_check_branch
      %18 = sbr.rel (0) target = $region13
    $region12: #{tpu_custom_call.1} parent=1 // pred_region
      _
    $region13: #{tpu_custom_call.1} parent=1 // pred_fallthru
      _
    // Predicated region
    $region14: #{tpu_custom_call.1} parent=1 // pred_check
      _
    $region15: #{tpu_custom_call.1} parent=1 // pred_check_branch
      %20 = sbr.rel (0) target = $region17
    $region16: #{tpu_custom_call.1} parent=1 // pred_region
      %s22 = ssub.s32 4096, 4096
      %23 = vsyncadd [#allocation3], %s22
      %s24 = sshll.u32 [#allocation2], 4
      %s25 = int_to_ptr.vmem [resolvable:$true] %s24
      %30 = dma.hbm_to_vmem [thread:$0]  %s3, 4096, %s25, [#allocation3], 256, 256, 16
    $region17: #{tpu_custom_call.1} parent=1 // pred_fallthru
      _
    // Predicated region
    $region18: #{tpu_custom_call.1} parent=1 // pred_check
      _
    $region19: #{tpu_custom_call.1} parent=1 // pred_check_branch
      %32 = sbr.rel (0) target = $region21
    $region20: #{tpu_custom_call.1} parent=1 // pred_region
      %s34 = ssub.s32 4096, 4096
      %35 = vsyncadd [#allocation5], %s34
      %s36 = sshll.u32 [#allocation4], 4
      %s37 = int_to_ptr.vmem [resolvable:$true] %s36
      %42 = dma.hbm_to_vmem [thread:$0]  %s4, 4096, %s37, [#allocation5], 256, 256, 16
    $region21: #{tpu_custom_call.1} parent=1 // pred_fallthru
      _
    // Predicated region
    $region22: #{tpu_custom_call.1} parent=1 // pred_check
      _
    $region23: #{tpu_custom_call.1} parent=1 // pred_check_branch
      %44 = sbr.rel (0) target = $region25
    $region24: #{tpu_custom_call.1} parent=1 // pred_region
      _
    $region25: #{tpu_custom_call.1} parent=1 // pred_fallthru
      _
    // Predicated region
    $region26: #{tpu_custom_call.1} parent=1 // pred_check
      _
    $region27: #{tpu_custom_call.1} parent=1 // pred_check_branch
      %46 = sbr.rel (0) target = $region29
    $region28: #{tpu_custom_call.1} parent=1 // pred_region
      %47 = dma.done [#allocation3], 4096
    $region29: #{tpu_custom_call.1} parent=1 // pred_fallthru
      _
    // Predicated region
    $region30: #{tpu_custom_call.1} parent=1 // pred_check
      _
    $region31: #{tpu_custom_call.1} parent=1 // pred_check_branch
      %49 = sbr.rel (0) target = $region33
    $region32: #{tpu_custom_call.1} parent=1 // pred_region
      %50 = dma.done [#allocation5], 4096
    $region33: #{tpu_custom_call.1} parent=1 // pred_fallthru
      _
    %v52 = vld [vmem:[%s1] sm:$0x3]
    %v53 = vld [vmem:[%s1 + $0x2] sm:$0x3]
    %v54 = vld [vmem:[%s1 + $0x4] sm:$0x3]
    %v55 = vld [vmem:[%s1 + $0x6] sm:$0x3]
    %v56 = vld [vmem:[%s1 + $0x8] sm:$0x3]
    %v57 = vld [vmem:[%s1 + $0xa] sm:$0x3]
    %v58 = vld [vmem:[%s1 + $0xc] sm:$0x3]
    %v59 = vld [vmem:[%s1 + $0xe] sm:$0x3]
    %v60 = vld [vmem:[%s2] sm:$0x3]
    %v61 = vld [vmem:[%s2 + $0x2] sm:$0x3]
    %v62 = vld [vmem:[%s2 + $0x4] sm:$0x3]
    %v63 = vld [vmem:[%s0] sm:$0x1]
    %v64 = vld [vmem:[%s0 + $0x1] sm:$0x1]
    %v65 = vld [vmem:[%s0 + $0x2] sm:$0x1]
    %v66 = vld [vmem:[#allocation2] sm:$0xff]
    %v67 = vld [vmem:[#allocation2 + $0x8] sm:$0xff]
    %v68 = vld [vmem:[#allocation2 + $0x10] sm:$0xff]
    %v69 = vld [vmem:[#allocation2 + $0x18] sm:$0xff]
    %v70 = vld [vmem:[#allocation2 + $0x20] sm:$0xff]
    %v71 = vld [vmem:[#allocation2 + $0x28] sm:$0xff]
    %v72 = vld [vmem:[#allocation2 + $0x30] sm:$0xff]
    %v73 = vld [vmem:[#allocation2 + $0x38] sm:$0xff]
    %v74 = vld [vmem:[#allocation2 + $0x40] sm:$0xff]
    %v75 = vld [vmem:[#allocation2 + $0x48] sm:$0xff]
    %v76 = vld [vmem:[#allocation2 + $0x50] sm:$0xff]
    %v77 = vld [vmem:[#allocation2 + $0x58] sm:$0xff]
    %v78 = vld [vmem:[#allocation2 + $0x60] sm:$0xff]
    %v79 = vld [vmem:[#allocation2 + $0x68] sm:$0xff]
    %v80 = vld [vmem:[#allocation2 + $0x70] sm:$0xff]
    %v81 = vld [vmem:[#allocation2 + $0x78] sm:$0xff]
    %v82 = vld [vmem:[#allocation2 + $0x80] sm:$0xff]
    %v83 = vld [vmem:[#allocation2 + $0x88] sm:$0xff]
    %v84 = vld [vmem:[#allocation2 + $0x90] sm:$0xff]
    %v85 = vld [vmem:[#allocation2 + $0x98] sm:$0xff]
    %v86 = vld [vmem:[#allocation2 + $0xa0] sm:$0xff]
    %v87 = vld [vmem:[#allocation2 + $0xa8] sm:$0xff]
    %v88 = vld [vmem:[#allocation2 + $0xb0] sm:$0xff]
    %v89 = vld [vmem:[#allocation2 + $0xb8] sm:$0xff]
    %v90 = vld [vmem:[#allocation2 + $0xc0] sm:$0xff]
    %v91 = vld [vmem:[#allocation2 + $0xc8] sm:$0xff]
    %v92 = vld [vmem:[#allocation2 + $0xd0] sm:$0xff]
    %v93 = vld [vmem:[#allocation2 + $0xd8] sm:$0xff]
    %v94 = vld [vmem:[#allocation2 + $0xe0] sm:$0xff]
    %v95 = vld [vmem:[#allocation2 + $0xe8] sm:$0xff]
    %v96 = vld [vmem:[#allocation2 + $0xf0] sm:$0xff]
    %v97 = vld [vmem:[#allocation2 + $0xf8] sm:$0xff]
    %v98 = vld [vmem:[#allocation4] sm:$0xff]
    %v99 = vld [vmem:[#allocation4 + $0x8] sm:$0xff]
    %v100 = vld [vmem:[#allocation4 + $0x10] sm:$0xff]
    %v101 = vld [vmem:[#allocation4 + $0x18] sm:$0xff]
    %v102 = vld [vmem:[#allocation4 + $0x20] sm:$0xff]
    %v103 = vld [vmem:[#allocation4 + $0x28] sm:$0xff]
    %v104 = vld [vmem:[#allocation4 + $0x30] sm:$0xff]
    %v105 = vld [vmem:[#allocation4 + $0x38] sm:$0xff]
    %v106 = vld [vmem:[#allocation4 + $0x40] sm:$0xff]
    %v107 = vld [vmem:[#allocation4 + $0x48] sm:$0xff]
    %v108 = vld [vmem:[#allocation4 + $0x50] sm:$0xff]
    %v109 = vld [vmem:[#allocation4 + $0x58] sm:$0xff]
    %v110 = vld [vmem:[#allocation4 + $0x60] sm:$0xff]
    %v111 = vld [vmem:[#allocation4 + $0x68] sm:$0xff]
    %v112 = vld [vmem:[#allocation4 + $0x70] sm:$0xff]
    %v113 = vld [vmem:[#allocation4 + $0x78] sm:$0xff]
    %v114 = vld [vmem:[#allocation4 + $0x80] sm:$0xff]
    %v115 = vld [vmem:[#allocation4 + $0x88] sm:$0xff]
    %v116 = vld [vmem:[#allocation4 + $0x90] sm:$0xff]
    %v117 = vld [vmem:[#allocation4 + $0x98] sm:$0xff]
    %v118 = vld [vmem:[#allocation4 + $0xa0] sm:$0xff]
    %v119 = vld [vmem:[#allocation4 + $0xa8] sm:$0xff]
    %v120 = vld [vmem:[#allocation4 + $0xb0] sm:$0xff]
    %v121 = vld [vmem:[#allocation4 + $0xb8] sm:$0xff]
    %v122 = vld [vmem:[#allocation4 + $0xc0] sm:$0xff]
    %v123 = vld [vmem:[#allocation4 + $0xc8] sm:$0xff]
    %v124 = vld [vmem:[#allocation4 + $0xd0] sm:$0xff]
    %v125 = vld [vmem:[#allocation4 + $0xd8] sm:$0xff]
    %v126 = vld [vmem:[#allocation4 + $0xe0] sm:$0xff]
    %v127 = vld [vmem:[#allocation4 + $0xe8] sm:$0xff]
    %v128 = vld [vmem:[#allocation4 + $0xf0] sm:$0xff]
    %v129 = vld [vmem:[#allocation4 + $0xf8] sm:$0xff]
    %v130 = vld [vmem:[%s5] sm:$0xff]
    %v131 = vld [vmem:[%s5 + $0x8] sm:$0xff]
    %v132 = vld [vmem:[%s5 + $0x10] sm:$0xff]
    %v133 = vld [vmem:[%s5 + $0x18] sm:$0xff]
    %135 = vset.pattern.permute.xlu0 0
    %136 = vperm.xlu0 %135, %v52
    %v137 = vpop.permute.xlu0 %136
    %140 = vset.pattern.permute.xlu0 0
    %141 = vperm.xlu0 %140, %v53
    %v142 = vpop.permute.xlu0 %141
    %145 = vset.pattern.permute.xlu0 0
    %146 = vperm.xlu0 %145, %v54
    %v147 = vpop.permute.xlu0 %146
    %150 = vset.pattern.permute.xlu0 0
    %151 = vperm.xlu0 %150, %v55
    %v152 = vpop.permute.xlu0 %151
    %155 = vset.pattern.permute.xlu0 0
    %156 = vperm.xlu0 %155, %v56
    %v157 = vpop.permute.xlu0 %156
    %160 = vset.pattern.permute.xlu0 0
    %161 = vperm.xlu0 %160, %v57
    %v162 = vpop.permute.xlu0 %161
    %165 = vset.pattern.permute.xlu0 0
    %166 = vperm.xlu0 %165, %v58
    %v167 = vpop.permute.xlu0 %166
    %170 = vset.pattern.permute.xlu0 0
    %171 = vperm.xlu0 %170, %v59
    %v172 = vpop.permute.xlu0 %171
    %v174 = vlaneseq
    %v175 = vshrl.u32 %v174, 7
    %v176 = vsub.s32 0, %v175
    %v177 = vrot.slane %v130, %v176
    %v178 = vlaneseq
    %v179 = vshrl.u32 %v178, 7
    %v180 = vsub.s32 0, %v179
    %v181 = vrot.slane %v131, %v180
    %v182 = vlaneseq
    %v183 = vshrl.u32 %v182, 7
    %v184 = vsub.s32 0, %v183
    %v185 = vrot.slane %v132, %v184
    %v186 = vlaneseq
    %v187 = vshrl.u32 %v186, 7
    %v188 = vsub.s32 0, %v187
    %v189 = vrot.slane %v133, %v188
    %v190 = vmul.f32 %v137, %v177
    %v191 = vmul.f32 %v137, %v185
    %v192 = vmul.f32 %v137, %v189
    %v193 = vmul.f32 %v142, %v177
    %v194 = vmul.f32 %v142, %v181
    %v195 = vmul.f32 %v142, %v185
    %v196 = vmul.f32 %v142, %v189
    %v197 = vmul.f32 %v147, %v177
    %v198 = vmul.f32 %v147, %v181
    %v199 = vmul.f32 %v147, %v185
    %v200 = vmul.f32 %v147, %v189
    %v201 = vmul.f32 %v152, %v177
    %v202 = vmul.f32 %v152, %v181
    %v203 = vmul.f32 %v152, %v185
    %v204 = vmul.f32 %v152, %v189
    %v205 = vmul.f32 %v157, %v177
    %v206 = vmul.f32 %v157, %v181
    %v207 = vmul.f32 %v157, %v185
    %v208 = vmul.f32 %v157, %v189
    %v209 = vmul.f32 %v162, %v177
    %v210 = vmul.f32 %v162, %v181
    %v211 = vmul.f32 %v162, %v185
    %v212 = vmul.f32 %v162, %v189
    %v213 = vmul.f32 %v167, %v177
    %v214 = vmul.f32 %v167, %v181
    %v215 = vmul.f32 %v167, %v185
    %v216 = vmul.f32 %v167, %v189
    %v217 = vmul.f32 %v172, %v177
    %v218 = vmul.f32 %v172, %v181
    %v219 = vmul.f32 %v172, %v185
    %v220 = vmul.f32 %v172, %v189
    %v221 = vlaneseq
    %v222 = vshrl.u32 %v221, 7
    %v223 = vsub.s32 1, %v222
    %v224 = vrot.slane %v130, %v223
    %v225 = vlaneseq
    %v226 = vshrl.u32 %v225, 7
    %v227 = vsub.s32 1, %v226
    %v228 = vrot.slane %v131, %v227
    %v229 = vlaneseq
    %v230 = vshrl.u32 %v229, 7
    %v231 = vsub.s32 1, %v230
    %v232 = vrot.slane %v132, %v231
    %v233 = vlaneseq
    %v234 = vshrl.u32 %v233, 7
    %v235 = vsub.s32 1, %v234
    %v236 = vrot.slane %v133, %v235
    %v237 = vadd.f32 %v190, %v224
    %v238 = vadd.f32 %v191, %v232
    %v239 = vadd.f32 %v192, %v236
    %v240 = vadd.f32 %v193, %v224
    %v241 = vadd.f32 %v194, %v228
    %v242 = vadd.f32 %v195, %v232
    %v243 = vadd.f32 %v196, %v236
    %v244 = vadd.f32 %v197, %v224
    %v245 = vadd.f32 %v198, %v228
    %v246 = vadd.f32 %v199, %v232
    %v247 = vadd.f32 %v200, %v236
    %v248 = vadd.f32 %v201, %v224
    %v249 = vadd.f32 %v202, %v228
    %v250 = vadd.f32 %v203, %v232
    %v251 = vadd.f32 %v204, %v236
    %v252 = vadd.f32 %v205, %v224
    %v253 = vadd.f32 %v206, %v228
    %v254 = vadd.f32 %v207, %v232
    %v255 = vadd.f32 %v208, %v236
    %v256 = vadd.f32 %v209, %v224
    %v257 = vadd.f32 %v210, %v228
    %v258 = vadd.f32 %v211, %v232
    %v259 = vadd.f32 %v212, %v236
    %v260 = vadd.f32 %v213, %v224
    %v261 = vadd.f32 %v214, %v228
    %v262 = vadd.f32 %v215, %v232
    %v263 = vadd.f32 %v216, %v236
    %v264 = vadd.f32 %v217, %v224
    %v265 = vadd.f32 %v218, %v228
    %v266 = vadd.f32 %v219, %v232
    %v267 = vadd.f32 %v220, %v236
    %269 = vset.pattern.permute.xlu0 0
    %270 = vperm.xlu0 %269, %v60
    %v271 = vpop.permute.xlu0 %270
    %274 = vset.pattern.permute.xlu0 0
    %275 = vperm.xlu0 %274, %v61
    %v276 = vpop.permute.xlu0 %275
    %279 = vset.pattern.permute.xlu0 0
    %280 = vperm.xlu0 %279, %v62
    %v281 = vpop.permute.xlu0 %280
    %v283 = vlaneseq
    %v284 = vshrl.u32 %v283, 7
    %v285 = vsub.s32 2, %v284
    %v286 = vrot.slane %v130, %v285
    %v287 = vlaneseq
    %v288 = vshrl.u32 %v287, 7
    %v289 = vsub.s32 2, %v288
    %v290 = vrot.slane %v131, %v289
    %v291 = vlaneseq
    %v292 = vshrl.u32 %v291, 7
    %v293 = vsub.s32 2, %v292
    %v294 = vrot.slane %v132, %v293
    %v295 = vlaneseq
    %v296 = vshrl.u32 %v295, 7
    %v297 = vsub.s32 2, %v296
    %v298 = vrot.slane %v133, %v297
    %v299 = vmul.f32 %v271, %v286
    %v300 = vmul.f32 %v271, %v290
    %v301 = vmul.f32 %v271, %v294
    %v302 = vmul.f32 %v271, %v298
    %v303 = vmul.f32 %v276, %v286
    %v304 = vmul.f32 %v276, %v290
    %v305 = vmul.f32 %v276, %v294
    %v306 = vmul.f32 %v276, %v298
    %v307 = vmul.f32 %v281, %v286
    %v308 = vmul.f32 %v281, %v290
    %v309 = vmul.f32 %v281, %v294
    %v310 = vmul.f32 %v281, %v298
    %v311 = vlaneseq
    %v312 = vshrl.u32 %v311, 7
    %v313 = vsub.s32 3, %v312
    %v314 = vrot.slane %v130, %v313
    %v315 = vlaneseq
    %v316 = vshrl.u32 %v315, 7
    %v317 = vsub.s32 3, %v316
    %v318 = vrot.slane %v131, %v317
    %v319 = vlaneseq
    %v320 = vshrl.u32 %v319, 7
    %v321 = vsub.s32 3, %v320
    %v322 = vrot.slane %v132, %v321
    %v323 = vlaneseq
    %v324 = vshrl.u32 %v323, 7
    %v325 = vsub.s32 3, %v324
    %v326 = vrot.slane %v133, %v325
    %v327 = vadd.f32 %v299, %v314
    %v328 = vadd.f32 %v300, %v318
    %v329 = vadd.f32 %v301, %v322
    %v330 = vadd.f32 %v302, %v326
    %v331 = vadd.f32 %v303, %v314
    %v332 = vadd.f32 %v304, %v318
    %v333 = vadd.f32 %v305, %v322
    %v334 = vadd.f32 %v306, %v326
    %v335 = vadd.f32 %v307, %v314
    %v336 = vadd.f32 %v308, %v318
    %v337 = vadd.f32 %v309, %v322
    %v338 = vadd.f32 %v310, %v326
    %v339 = vmul.f32 %v172, %v286
    %v340 = vmul.f32 %v172, %v290
    %v341 = vmul.f32 %v172, %v294
    %v342 = vmul.f32 %v172, %v298
    %v343 = vadd.f32 %v339, %v314
    %v344 = vadd.f32 %v340, %v318
    %v345 = vadd.f32 %v341, %v322
    %v346 = vadd.f32 %v342, %v326
    %v350 = vlaneseq
    %v351 = vshrl.u32 %v350, 7
    %v352 = vsub.s32 0, %v351
    %v353 = vrot.slane %v63, %v352
    %v354 = vlaneseq
    %v355 = vshrl.u32 %v354, 7
    %v356 = vsub.s32 0, %v355
    %v357 = vrot.slane %v64, %v356
    %v358 = vlaneseq
    %v359 = vshrl.u32 %v358, 7
    %v360 = vsub.s32 0, %v359
    %v361 = vrot.slane %v65, %v360
    %362 = vset.pattern.permute.xlu0 0
    %363 = vperm.xlu0 %362, %v353
    %v364 = vpop.permute.xlu0 %363
    %366 = vset.pattern.permute.xlu0 0
    %367 = vperm.xlu0 %366, %v357
    %v368 = vpop.permute.xlu0 %367
    %370 = vset.pattern.permute.xlu0 0
    %371 = vperm.xlu0 %370, %v361
    %v372 = vpop.permute.xlu0 %371
    %v374 = vmul.f32 %v364, %v327
    %v375 = vmul.f32 %v364, %v328
    %v376 = vmul.f32 %v364, %v329
    %v377 = vmul.f32 %v364, %v330
    %v378 = vmul.f32 %v368, %v331
    %v379 = vmul.f32 %v368, %v332
    %v380 = vmul.f32 %v368, %v333
    %v381 = vmul.f32 %v368, %v334
    %v382 = vmul.f32 %v372, %v335
    %v383 = vmul.f32 %v372, %v336
    %v384 = vmul.f32 %v372, %v337
    %v385 = vmul.f32 %v372, %v338
    %v386 = vsub.f32 1.0, %v63
    %v387 = vsub.f32 1.0, %v64
    %v388 = vsub.f32 1.0, %v65
    %v389 = vxor.u32 %v237, 2147483648
    %v390 = vmul.f32 %v389, 1.442695
    %v391 = vpow.pop %v390
    %v392 = vadd.f32 %v391, 1.0
    %v393 = vrcp.pop %v392
    %v394 = vmul.f32 1.0, %v393
    %v395 = vtanh.pop %v238
    %v396 = vxor.u32 %v239, 2147483648
    %v397 = vmul.f32 %v396, 1.442695
    %v398 = vpow.pop %v397
    %v399 = vadd.f32 %v398, 1.0
    %v400 = vrcp.pop %v399
    %v401 = vmul.f32 1.0, %v400
    %v402 = vmul.f32 %v394, %v395
    %v403 = vtanh.pop %v402
    %v404 = vmul.f32 %v401, %v403
    %v405 = vpack.c.bf16 %v404, %v404
    %v438 = vunpack.c.l.b16 %v66
    %v439 = vunpack.c.h.b16 %v66
    %v440 = vunpack.c.l.b16 %v67
    %v441 = vunpack.c.h.b16 %v67
    %v442 = vunpack.c.l.b16 %v68
    %v443 = vunpack.c.h.b16 %v68
    %v444 = vunpack.c.l.b16 %v69
    %v445 = vunpack.c.h.b16 %v69
    %v446 = vunpack.c.l.b16 %v70
    %v447 = vunpack.c.h.b16 %v70
    %v448 = vunpack.c.l.b16 %v71
    %v449 = vunpack.c.h.b16 %v71
    %v450 = vunpack.c.l.b16 %v72
    %v451 = vunpack.c.h.b16 %v72
    %v452 = vunpack.c.l.b16 %v73
    %v453 = vunpack.c.h.b16 %v73
    %v454 = vunpack.c.l.b16 %v74
    %v455 = vunpack.c.h.b16 %v74
    %v456 = vunpack.c.l.b16 %v75
    %v457 = vunpack.c.h.b16 %v75
    %v458 = vunpack.c.l.b16 %v76
    %v459 = vunpack.c.h.b16 %v76
    %v460 = vunpack.c.l.b16 %v77
    %v461 = vunpack.c.h.b16 %v77
    %v462 = vunpack.c.l.b16 %v78
    %v463 = vunpack.c.h.b16 %v78
    %v464 = vunpack.c.l.b16 %v79
    %v465 = vunpack.c.h.b16 %v79
    %v466 = vunpack.c.l.b16 %v80
    %v467 = vunpack.c.h.b16 %v80
    %v468 = vunpack.c.l.b16 %v81
    %v469 = vunpack.c.h.b16 %v81
    %v470 = vunpack.c.l.b16 %v82
    %v471 = vunpack.c.h.b16 %v82
    %v472 = vunpack.c.l.b16 %v83
    %v473 = vunpack.c.h.b16 %v83
    %v474 = vunpack.c.l.b16 %v84
    %v475 = vunpack.c.h.b16 %v84
    %v476 = vunpack.c.l.b16 %v85
    %v477 = vunpack.c.h.b16 %v85
    %v478 = vunpack.c.l.b16 %v86
    %v479 = vunpack.c.h.b16 %v86
    %v480 = vunpack.c.l.b16 %v87
    %v481 = vunpack.c.h.b16 %v87
    %v482 = vunpack.c.l.b16 %v88
    %v483 = vunpack.c.h.b16 %v88
    %v484 = vunpack.c.l.b16 %v89
    %v485 = vunpack.c.h.b16 %v89
    %v486 = vunpack.c.l.b16 %v90
    %v487 = vunpack.c.h.b16 %v90
    %v488 = vunpack.c.l.b16 %v91
    %v489 = vunpack.c.h.b16 %v91
    %v490 = vunpack.c.l.b16 %v92
    %v491 = vunpack.c.h.b16 %v92
    %v492 = vunpack.c.l.b16 %v93
    %v493 = vunpack.c.h.b16 %v93
    %v494 = vunpack.c.l.b16 %v94
    %v495 = vunpack.c.h.b16 %v94
    %v496 = vunpack.c.l.b16 %v95
    %v497 = vunpack.c.h.b16 %v95
    %v498 = vunpack.c.l.b16 %v96
    %v499 = vunpack.c.h.b16 %v96
    %v500 = vunpack.c.l.b16 %v97
    %v501 = vunpack.c.h.b16 %v97
    %v502 = vpack.c.b16 %v442, %v438
    %v503 = vpack.c.b16 %v443, %v439
    %v504 = vpack.c.b16 %v444, %v440
    %v505 = vpack.c.b16 %v445, %v441
    %v506 = vpack.c.b16 %v450, %v446
    %v507 = vpack.c.b16 %v451, %v447
    %v508 = vpack.c.b16 %v452, %v448
    %v509 = vpack.c.b16 %v453, %v449
    %v510 = vpack.c.b16 %v458, %v454
    %v511 = vpack.c.b16 %v459, %v455
    %v512 = vpack.c.b16 %v460, %v456
    %v513 = vpack.c.b16 %v461, %v457
    %v514 = vpack.c.b16 %v466, %v462
    %v515 = vpack.c.b16 %v467, %v463
    %v516 = vpack.c.b16 %v468, %v464
    %v517 = vpack.c.b16 %v469, %v465
    %v518 = vpack.c.b16 %v474, %v470
    %v519 = vpack.c.b16 %v475, %v471
    %v520 = vpack.c.b16 %v476, %v472
    %v521 = vpack.c.b16 %v477, %v473
    %v522 = vpack.c.b16 %v482, %v478
    %v523 = vpack.c.b16 %v483, %v479
    %v524 = vpack.c.b16 %v484, %v480
    %v525 = vpack.c.b16 %v485, %v481
    %v526 = vpack.c.b16 %v490, %v486
    %v527 = vpack.c.b16 %v491, %v487
    %v528 = vpack.c.b16 %v492, %v488
    %v529 = vpack.c.b16 %v493, %v489
    %v530 = vpack.c.b16 %v498, %v494
    %v531 = vpack.c.b16 %v499, %v495
    %v532 = vpack.c.b16 %v500, %v496
    %v533 = vpack.c.b16 %v501, %v497
    %566 = vmatprep.subr.bf16.mxu0 %v503
    %567 = vmatpush1.bf16.msra.mxu0 %v502
    %568 = vmatprep.subr.bf16.mxu0 %v507
    %569 = vmatpush1.bf16.msra.mxu0 %v506
    %570 = vmatprep.subr.bf16.mxu0 %v511
    %571 = vmatpush1.bf16.msra.mxu0 %v510
    %572 = vmatprep.subr.bf16.mxu0 %v515
    %573 = vmatpush1.bf16.msra.mxu0 %v514
    %574 = vmatprep.subr.bf16.mxu0 %v519
    %575 = vmatpush1.bf16.msra.mxu0 %v518
    %576 = vmatprep.subr.bf16.mxu0 %v523
    %577 = vmatpush1.bf16.msra.mxu0 %v522
    %578 = vmatprep.subr.bf16.mxu0 %v527
    %579 = vmatpush1.bf16.msra.mxu0 %v526
    %580 = vmatprep.subr.bf16.mxu0 %v531
    %581 = vmatpush1.bf16.msra.mxu0 %v530
    %582 = vmatprep.subr.bf16.mxu0 0
    %583 = vmatpush1.bf16.msra.mxu0 0
    %584 = vmatprep.subr.bf16.mxu0 0
    %585 = vmatpush1.bf16.msra.mxu0 0
    %586 = vmatprep.subr.bf16.mxu0 0
    %587 = vmatpush1.bf16.msra.mxu0 0
    %588 = vmatprep.subr.bf16.mxu0 0
    %589 = vmatpush1.bf16.msra.mxu0 0
    %590 = vmatprep.subr.bf16.mxu0 0
    %591 = vmatpush1.bf16.msra.mxu0 0
    %592 = vmatprep.subr.bf16.mxu0 0
    %593 = vmatpush1.bf16.msra.mxu0 0
    %594 = vmatprep.subr.bf16.mxu0 0
    %595 = vmatpush1.bf16.msra.mxu0 0
    %596 = vmatprep.subr.bf16.mxu0 0
    %597 = vmatpush1.bf16.msra.mxu0 0
    %598 = vmatprep.mubr.bf16.mxu0 0
    %599 = vmatmul.mubr.bf16.gmra.mrb[0].mxu0 %v405
    %v600 = vpop.f32.mrb[0].mxu0
    %v601 = vadd.f32 0.0, %v600
    %v602 = vpop.f32.mrb[0].mxu0
    %v603 = vadd.f32 0.0, %v602
    %v604 = vpop.f32.mrb[0].mxu0
    %v605 = vpop.f32.mrb[0].mxu0
    %606 = vdwg.mxu0
    %607 = vmatprep.subr.bf16.mxu0 %v505
    %608 = vmatpush1.bf16.msra.mxu0 %v504
    %609 = vmatprep.subr.bf16.mxu0 %v509
    %610 = vmatpush1.bf16.msra.mxu0 %v508
    %611 = vmatprep.subr.bf16.mxu0 %v513
    %612 = vmatpush1.bf16.msra.mxu0 %v512
    %613 = vmatprep.subr.bf16.mxu0 %v517
    %614 = vmatpush1.bf16.msra.mxu0 %v516
    %615 = vmatprep.subr.bf16.mxu0 %v521
    %616 = vmatpush1.bf16.msra.mxu0 %v520
    %617 = vmatprep.subr.bf16.mxu0 %v525
    %618 = vmatpush1.bf16.msra.mxu0 %v524
    %619 = vmatprep.subr.bf16.mxu0 %v529
    %620 = vmatpush1.bf16.msra.mxu0 %v528
    %621 = vmatprep.subr.bf16.mxu0 %v533
    %622 = vmatpush1.bf16.msra.mxu0 %v532
    %623 = vmatprep.subr.bf16.mxu0 0
    %624 = vmatpush1.bf16.msra.mxu0 0
    %625 = vmatprep.subr.bf16.mxu0 0
    %626 = vmatpush1.bf16.msra.mxu0 0
    %627 = vmatprep.subr.bf16.mxu0 0
    %628 = vmatpush1.bf16.msra.mxu0 0
    %629 = vmatprep.subr.bf16.mxu0 0
    %630 = vmatpush1.bf16.msra.mxu0 0
    %631 = vmatprep.subr.bf16.mxu0 0
    %632 = vmatpush1.bf16.msra.mxu0 0
    %633 = vmatprep.subr.bf16.mxu0 0
    %634 = vmatpush1.bf16.msra.mxu0 0
    %635 = vmatprep.subr.bf16.mxu0 0
    %636 = vmatpush1.bf16.msra.mxu0 0
    %637 = vmatprep.subr.bf16.mxu0 0
    %638 = vmatpush1.bf16.msra.mxu0 0
    %639 = vmatprep.mubr.bf16.mxu0 0
    %640 = vmatmul.mubr.bf16.gmra.mrb[0].mxu0 %v405
    %v641 = vpop.f32.mrb[0].mxu0
    %v642 = vadd.f32 0.0, %v641
    %v643 = vpop.f32.mrb[0].mxu0
    %v644 = vadd.f32 0.0, %v643
    %v645 = vpop.f32.mrb[0].mxu0
    %v646 = vpop.f32.mrb[0].mxu0
    %647 = vdwg.mxu0
    %v648 = vadd.f32 %v240, %v601
    %v649 = vadd.f32 %v241, %v603
    %v650 = vadd.f32 %v242, %v642
    %v651 = vadd.f32 %v243, %v644
    %v652 = vxor.u32 %v648, 2147483648
    %v653 = vmul.f32 %v652, 1.442695
    %v654 = vpow.pop %v653
    %v655 = vadd.f32 %v654, 1.0
    %v656 = vrcp.pop %v655
    %v657 = vmul.f32 1.0, %v656
    %v658 = vxor.u32 %v649, 2147483648
    %v659 = vmul.f32 %v658, 1.442695
    %v660 = vpow.pop %v659
    %v661 = vadd.f32 %v660, 1.0
    %v662 = vrcp.pop %v661
    %v663 = vmul.f32 1.0, %v662
    %v664 = vtanh.pop %v650
    %v665 = vxor.u32 %v651, 2147483648
    %v666 = vmul.f32 %v665, 1.442695
    %v667 = vpow.pop %v666
    %v668 = vadd.f32 %v667, 1.0
    %v669 = vrcp.pop %v668
    %v670 = vmul.f32 1.0, %v669
    %v671 = vmul.f32 %v663, %v402
    %v672 = vmul.f32 %v657, %v664
    %v673 = vadd.f32 %v671, %v672
    %v674 = vtanh.pop %v673
    %v675 = vmul.f32 %v670, %v674
    %v676 = vpack.c.bf16 %v675, %v675
    %677 = vmatprep.subr.bf16.mxu0 %v503
    %678 = vmatpush1.bf16.msra.mxu0 %v502
    %679 = vmatprep.subr.bf16.mxu0 %v507
    %680 = vmatpush1.bf16.msra.mxu0 %v506
    %681 = vmatprep.subr.bf16.mxu0 %v511
    %682 = vmatpush1.bf16.msra.mxu0 %v510
    %683 = vmatprep.subr.bf16.mxu0 %v515
    %684 = vmatpush1.bf16.msra.mxu0 %v514
    %685 = vmatprep.subr.bf16.mxu0 %v519
    %686 = vmatpush1.bf16.msra.mxu0 %v518
    %687 = vmatprep.subr.bf16.mxu0 %v523
    %688 = vmatpush1.bf16.msra.mxu0 %v522
    %689 = vmatprep.subr.bf16.mxu0 %v527
    %690 = vmatpush1.bf16.msra.mxu0 %v526
    %691 = vmatprep.subr.bf16.mxu0 %v531
    %692 = vmatpush1.bf16.msra.mxu0 %v530
    %693 = vmatprep.subr.bf16.mxu0 0
    %694 = vmatpush1.bf16.msra.mxu0 0
    %695 = vmatprep.subr.bf16.mxu0 0
    %696 = vmatpush1.bf16.msra.mxu0 0
    %697 = vmatprep.subr.bf16.mxu0 0
    %698 = vmatpush1.bf16.msra.mxu0 0
    %699 = vmatprep.subr.bf16.mxu0 0
    %700 = vmatpush1.bf16.msra.mxu0 0
    %701 = vmatprep.subr.bf16.mxu0 0
    %702 = vmatpush1.bf16.msra.mxu0 0
    %703 = vmatprep.subr.bf16.mxu0 0
    %704 = vmatpush1.bf16.msra.mxu0 0
    %705 = vmatprep.subr.bf16.mxu0 0
    %706 = vmatpush1.bf16.msra.mxu0 0
    %707 = vmatprep.subr.bf16.mxu0 0
    %708 = vmatpush1.bf16.msra.mxu0 0
    %709 = vmatprep.mubr.bf16.mxu0 0
    %710 = vmatmul.mubr.bf16.gmra.mrb[0].mxu0 %v676
    %v711 = vpop.f32.mrb[0].mxu0
    %v712 = vadd.f32 0.0, %v711
    %v713 = vpop.f32.mrb[0].mxu0
    %v714 = vadd.f32 0.0, %v713
    %v715 = vpop.f32.mrb[0].mxu0
    %v716 = vpop.f32.mrb[0].mxu0
    %717 = vdwg.mxu0
    %718 = vmatprep.subr.bf16.mxu0 %v505
    %719 = vmatpush1.bf16.msra.mxu0 %v504
    %720 = vmatprep.subr.bf16.mxu0 %v509
    %721 = vmatpush1.bf16.msra.mxu0 %v508
    %722 = vmatprep.subr.bf16.mxu0 %v513
    %723 = vmatpush1.bf16.msra.mxu0 %v512
    %724 = vmatprep.subr.bf16.mxu0 %v517
    %725 = vmatpush1.bf16.msra.mxu0 %v516
    %726 = vmatprep.subr.bf16.mxu0 %v521
    %727 = vmatpush1.bf16.msra.mxu0 %v520
    %728 = vmatprep.subr.bf16.mxu0 %v525
    %729 = vmatpush1.bf16.msra.mxu0 %v524
    %730 = vmatprep.subr.bf16.mxu0 %v529
    %731 = vmatpush1.bf16.msra.mxu0 %v528
    %732 = vmatprep.subr.bf16.mxu0 %v533
    %733 = vmatpush1.bf16.msra.mxu0 %v532
    %734 = vmatprep.subr.bf16.mxu0 0
    %735 = vmatpush1.bf16.msra.mxu0 0
    %736 = vmatprep.subr.bf16.mxu0 0
    %737 = vmatpush1.bf16.msra.mxu0 0
    %738 = vmatprep.subr.bf16.mxu0 0
    %739 = vmatpush1.bf16.msra.mxu0 0
    %740 = vmatprep.subr.bf16.mxu0 0
    %741 = vmatpush1.bf16.msra.mxu0 0
    %742 = vmatprep.subr.bf16.mxu0 0
    %743 = vmatpush1.bf16.msra.mxu0 0
    %744 = vmatprep.subr.bf16.mxu0 0
    %745 = vmatpush1.bf16.msra.mxu0 0
    %746 = vmatprep.subr.bf16.mxu0 0
    %747 = vmatpush1.bf16.msra.mxu0 0
    %748 = vmatprep.subr.bf16.mxu0 0
    %749 = vmatpush1.bf16.msra.mxu0 0
    %750 = vmatprep.mubr.bf16.mxu0 0
    %751 = vmatmul.mubr.bf16.gmra.mrb[0].mxu0 %v676
    %v752 = vpop.f32.mrb[0].mxu0
    %v753 = vadd.f32 0.0, %v752
    %v754 = vpop.f32.mrb[0].mxu0
    %v755 = vadd.f32 0.0, %v754
    %v756 = vpop.f32.mrb[0].mxu0
    %v757 = vpop.f32.mrb[0].mxu0
    %758 = vdwg.mxu0
    %v759 = vadd.f32 %v244, %v712
    %v760 = vadd.f32 %v245, %v714
    %v761 = vadd.f32 %v246, %v753
    %v762 = vadd.f32 %v247, %v755
    %v763 = vxor.u32 %v759, 2147483648
    %v764 = vmul.f32 %v763, 1.442695
    %v765 = vpow.pop %v764
    %v766 = vadd.f32 %v765, 1.0
    %v767 = vrcp.pop %v766
    %v768 = vmul.f32 1.0, %v767
    %v769 = vxor.u32 %v760, 2147483648
    %v770 = vmul.f32 %v769, 1.442695
    %v771 = vpow.pop %v770
    %v772 = vadd.f32 %v771, 1.0
    %v773 = vrcp.pop %v772
    %v774 = vmul.f32 1.0, %v773
    %v775 = vtanh.pop %v761
    %v776 = vxor.u32 %v762, 2147483648
    %v777 = vmul.f32 %v776, 1.442695
    %v778 = vpow.pop %v777
    %v779 = vadd.f32 %v778, 1.0
    %v780 = vrcp.pop %v779
    %v781 = vmul.f32 1.0, %v780
    %v782 = vmul.f32 %v774, %v673
    %v783 = vmul.f32 %v768, %v775
    %v784 = vadd.f32 %v782, %v783
    %v785 = vtanh.pop %v784
    %v786 = vmul.f32 %v781, %v785
    %v787 = vpack.c.bf16 %v786, %v786
    %788 = vmatprep.subr.bf16.mxu0 %v503
    %789 = vmatpush1.bf16.msra.mxu0 %v502
    %790 = vmatprep.subr.bf16.mxu0 %v507
    %791 = vmatpush1.bf16.msra.mxu0 %v506
    %792 = vmatprep.subr.bf16.mxu0 %v511
    %793 = vmatpush1.bf16.msra.mxu0 %v510
    %794 = vmatprep.subr.bf16.mxu0 %v515
    %795 = vmatpush1.bf16.msra.mxu0 %v514
    %796 = vmatprep.subr.bf16.mxu0 %v519
    %797 = vmatpush1.bf16.msra.mxu0 %v518
    %798 = vmatprep.subr.bf16.mxu0 %v523
    %799 = vmatpush1.bf16.msra.mxu0 %v522
    %800 = vmatprep.subr.bf16.mxu0 %v527
    %801 = vmatpush1.bf16.msra.mxu0 %v526
    %802 = vmatprep.subr.bf16.mxu0 %v531
    %803 = vmatpush1.bf16.msra.mxu0 %v530
    %804 = vmatprep.subr.bf16.mxu0 0
    %805 = vmatpush1.bf16.msra.mxu0 0
    %806 = vmatprep.subr.bf16.mxu0 0
    %807 = vmatpush1.bf16.msra.mxu0 0
    %808 = vmatprep.subr.bf16.mxu0 0
    %809 = vmatpush1.bf16.msra.mxu0 0
    %810 = vmatprep.subr.bf16.mxu0 0
    %811 = vmatpush1.bf16.msra.mxu0 0
    %812 = vmatprep.subr.bf16.mxu0 0
    %813 = vmatpush1.bf16.msra.mxu0 0
    %814 = vmatprep.subr.bf16.mxu0 0
    %815 = vmatpush1.bf16.msra.mxu0 0
    %816 = vmatprep.subr.bf16.mxu0 0
    %817 = vmatpush1.bf16.msra.mxu0 0
    %818 = vmatprep.subr.bf16.mxu0 0
    %819 = vmatpush1.bf16.msra.mxu0 0
    %820 = vmatprep.mubr.bf16.mxu0 0
    %821 = vmatmul.mubr.bf16.gmra.mrb[0].mxu0 %v787
    %v822 = vpop.f32.mrb[0].mxu0
    %v823 = vadd.f32 0.0, %v822
    %v824 = vpop.f32.mrb[0].mxu0
    %v825 = vadd.f32 0.0, %v824
    %v826 = vpop.f32.mrb[0].mxu0
    %v827 = vpop.f32.mrb[0].mxu0
    %828 = vdwg.mxu0
    %829 = vmatprep.subr.bf16.mxu0 %v505
    %830 = vmatpush1.bf16.msra.mxu0 %v504
    %831 = vmatprep.subr.bf16.mxu0 %v509
    %832 = vmatpush1.bf16.msra.mxu0 %v508
    %833 = vmatprep.subr.bf16.mxu0 %v513
    %834 = vmatpush1.bf16.msra.mxu0 %v512
    %835 = vmatprep.subr.bf16.mxu0 %v517
    %836 = vmatpush1.bf16.msra.mxu0 %v516
    %837 = vmatprep.subr.bf16.mxu0 %v521
    %838 = vmatpush1.bf16.msra.mxu0 %v520
    %839 = vmatprep.subr.bf16.mxu0 %v525
    %840 = vmatpush1.bf16.msra.mxu0 %v524
    %841 = vmatprep.subr.bf16.mxu0 %v529
    %842 = vmatpush1.bf16.msra.mxu0 %v528
    %843 = vmatprep.subr.bf16.mxu0 %v533
    %844 = vmatpush1.bf16.msra.mxu0 %v532
    %845 = vmatprep.subr.bf16.mxu0 0
    %846 = vmatpush1.bf16.msra.mxu0 0
    %847 = vmatprep.subr.bf16.mxu0 0
    %848 = vmatpush1.bf16.msra.mxu0 0
    %849 = vmatprep.subr.bf16.mxu0 0
    %850 = vmatpush1.bf16.msra.mxu0 0
    %851 = vmatprep.subr.bf16.mxu0 0
    %852 = vmatpush1.bf16.msra.mxu0 0
    %853 = vmatprep.subr.bf16.mxu0 0
    %854 = vmatpush1.bf16.msra.mxu0 0
    %855 = vmatprep.subr.bf16.mxu0 0
    %856 = vmatpush1.bf16.msra.mxu0 0
    %857 = vmatprep.subr.bf16.mxu0 0
    %858 = vmatpush1.bf16.msra.mxu0 0
    %859 = vmatprep.subr.bf16.mxu0 0
    %860 = vmatpush1.bf16.msra.mxu0 0
    %861 = vmatprep.mubr.bf16.mxu0 0
    %862 = vmatmul.mubr.bf16.gmra.mrb[0].mxu0 %v787
    %v863 = vpop.f32.mrb[0].mxu0
    %v864 = vadd.f32 0.0, %v863
    %v865 = vpop.f32.mrb[0].mxu0
    %v866 = vadd.f32 0.0, %v865
    %v867 = vpop.f32.mrb[0].mxu0
    %v868 = vpop.f32.mrb[0].mxu0
    %869 = vdwg.mxu0
    %v870 = vadd.f32 %v248, %v823
    %v871 = vadd.f32 %v249, %v825
    %v872 = vadd.f32 %v250, %v864
    %v873 = vadd.f32 %v251, %v866
    %v874 = vxor.u32 %v870, 2147483648
    %v875 = vmul.f32 %v874, 1.442695
    %v876 = vpow.pop %v875
    %v877 = vadd.f32 %v876, 1.0
    %v878 = vrcp.pop %v877
    %v879 = vmul.f32 1.0, %v878
    %v880 = vxor.u32 %v871, 2147483648
    %v881 = vmul.f32 %v880, 1.442695
    %v882 = vpow.pop %v881
    %v883 = vadd.f32 %v882, 1.0
    %v884 = vrcp.pop %v883
    %v885 = vmul.f32 1.0, %v884
    %v886 = vtanh.pop %v872
    %v887 = vxor.u32 %v873, 2147483648
    %v888 = vmul.f32 %v887, 1.442695
    %v889 = vpow.pop %v888
    %v890 = vadd.f32 %v889, 1.0
    %v891 = vrcp.pop %v890
    %v892 = vmul.f32 1.0, %v891
    %v893 = vmul.f32 %v885, %v784
    %v894 = vmul.f32 %v879, %v886
    %v895 = vadd.f32 %v893, %v894
    %v896 = vtanh.pop %v895
    %v897 = vmul.f32 %v892, %v896
    %v898 = vpack.c.bf16 %v897, %v897
    %899 = vmatprep.subr.bf16.mxu0 %v503
    %900 = vmatpush1.bf16.msra.mxu0 %v502
    %901 = vmatprep.subr.bf16.mxu0 %v507
    %902 = vmatpush1.bf16.msra.mxu0 %v506
    %903 = vmatprep.subr.bf16.mxu0 %v511
    %904 = vmatpush1.bf16.msra.mxu0 %v510
    %905 = vmatprep.subr.bf16.mxu0 %v515
    %906 = vmatpush1.bf16.msra.mxu0 %v514
    %907 = vmatprep.subr.bf16.mxu0 %v519
    %908 = vmatpush1.bf16.msra.mxu0 %v518
    %909 = vmatprep.subr.bf16.mxu0 %v523
    %910 = vmatpush1.bf16.msra.mxu0 %v522
    %911 = vmatprep.subr.bf16.mxu0 %v527
    %912 = vmatpush1.bf16.msra.mxu0 %v526
    %913 = vmatprep.subr.bf16.mxu0 %v531
    %914 = vmatpush1.bf16.msra.mxu0 %v530
    %915 = vmatprep.subr.bf16.mxu0 0
    %916 = vmatpush1.bf16.msra.mxu0 0
    %917 = vmatprep.subr.bf16.mxu0 0
    %918 = vmatpush1.bf16.msra.mxu0 0
    %919 = vmatprep.subr.bf16.mxu0 0
    %920 = vmatpush1.bf16.msra.mxu0 0
    %921 = vmatprep.subr.bf16.mxu0 0
    %922 = vmatpush1.bf16.msra.mxu0 0
    %923 = vmatprep.subr.bf16.mxu0 0
    %924 = vmatpush1.bf16.msra.mxu0 0
    %925 = vmatprep.subr.bf16.mxu0 0
    %926 = vmatpush1.bf16.msra.mxu0 0
    %927 = vmatprep.subr.bf16.mxu0 0
    %928 = vmatpush1.bf16.msra.mxu0 0
    %929 = vmatprep.subr.bf16.mxu0 0
    %930 = vmatpush1.bf16.msra.mxu0 0
    %931 = vmatprep.mubr.bf16.mxu0 0
    %932 = vmatmul.mubr.bf16.gmra.mrb[0].mxu0 %v898
    %v933 = vpop.f32.mrb[0].mxu0
    %v934 = vadd.f32 0.0, %v933
    %v935 = vpop.f32.mrb[0].mxu0
    %v936 = vadd.f32 0.0, %v935
    %v937 = vpop.f32.mrb[0].mxu0
    %v938 = vpop.f32.mrb[0].mxu0
    %939 = vdwg.mxu0
    %940 = vmatprep.subr.bf16.mxu0 %v505
    %941 = vmatpush1.bf16.msra.mxu0 %v504
    %942 = vmatprep.subr.bf16.mxu0 %v509
    %943 = vmatpush1.bf16.msra.mxu0 %v508
    %944 = vmatprep.subr.bf16.mxu0 %v513
    %945 = vmatpush1.bf16.msra.mxu0 %v512
    %946 = vmatprep.subr.bf16.mxu0 %v517
    %947 = vmatpush1.bf16.msra.mxu0 %v516
    %948 = vmatprep.subr.bf16.mxu0 %v521
    %949 = vmatpush1.bf16.msra.mxu0 %v520
    %950 = vmatprep.subr.bf16.mxu0 %v525
    %951 = vmatpush1.bf16.msra.mxu0 %v524
    %952 = vmatprep.subr.bf16.mxu0 %v529
    %953 = vmatpush1.bf16.msra.mxu0 %v528
    %954 = vmatprep.subr.bf16.mxu0 %v533
    %955 = vmatpush1.bf16.msra.mxu0 %v532
    %956 = vmatprep.subr.bf16.mxu0 0
    %957 = vmatpush1.bf16.msra.mxu0 0
    %958 = vmatprep.subr.bf16.mxu0 0
    %959 = vmatpush1.bf16.msra.mxu0 0
    %960 = vmatprep.subr.bf16.mxu0 0
    %961 = vmatpush1.bf16.msra.mxu0 0
    %962 = vmatprep.subr.bf16.mxu0 0
    %963 = vmatpush1.bf16.msra.mxu0 0
    %964 = vmatprep.subr.bf16.mxu0 0
    %965 = vmatpush1.bf16.msra.mxu0 0
    %966 = vmatprep.subr.bf16.mxu0 0
    %967 = vmatpush1.bf16.msra.mxu0 0
    %968 = vmatprep.subr.bf16.mxu0 0
    %969 = vmatpush1.bf16.msra.mxu0 0
    %970 = vmatprep.subr.bf16.mxu0 0
    %971 = vmatpush1.bf16.msra.mxu0 0
    %972 = vmatprep.mubr.bf16.mxu0 0
    %973 = vmatmul.mubr.bf16.gmra.mrb[0].mxu0 %v898
    %v974 = vpop.f32.mrb[0].mxu0
    %v975 = vadd.f32 0.0, %v974
    %v976 = vpop.f32.mrb[0].mxu0
    %v977 = vadd.f32 0.0, %v976
    %v978 = vpop.f32.mrb[0].mxu0
    %v979 = vpop.f32.mrb[0].mxu0
    %980 = vdwg.mxu0
    %v981 = vadd.f32 %v252, %v934
    %v982 = vadd.f32 %v253, %v936
    %v983 = vadd.f32 %v254, %v975
    %v984 = vadd.f32 %v255, %v977
    %v985 = vxor.u32 %v981, 2147483648
    %v986 = vmul.f32 %v985, 1.442695
    %v987 = vpow.pop %v986
    %v988 = vadd.f32 %v987, 1.0
    %v989 = vrcp.pop %v988
    %v990 = vmul.f32 1.0, %v989
    %v991 = vxor.u32 %v982, 2147483648
    %v992 = vmul.f32 %v991, 1.442695
    %v993 = vpow.pop %v992
    %v994 = vadd.f32 %v993, 1.0
    %v995 = vrcp.pop %v994
    %v996 = vmul.f32 1.0, %v995
    %v997 = vtanh.pop %v983
    %v998 = vxor.u32 %v984, 2147483648
    %v999 = vmul.f32 %v998, 1.442695
    %v1000 = vpow.pop %v999
    %v1001 = vadd.f32 %v1000, 1.0
    %v1002 = vrcp.pop %v1001
    %v1003 = vmul.f32 1.0, %v1002
    %v1004 = vmul.f32 %v996, %v895
    %v1005 = vmul.f32 %v990, %v997
    %v1006 = vadd.f32 %v1004, %v1005
    %v1007 = vtanh.pop %v1006
    %v1008 = vmul.f32 %v1003, %v1007
    %v1009 = vpack.c.bf16 %v1008, %v1008
    %1010 = vmatprep.subr.bf16.mxu0 %v503
    %1011 = vmatpush1.bf16.msra.mxu0 %v502
    %1012 = vmatprep.subr.bf16.mxu0 %v507
    %1013 = vmatpush1.bf16.msra.mxu0 %v506
    %1014 = vmatprep.subr.bf16.mxu0 %v511
    %1015 = vmatpush1.bf16.msra.mxu0 %v510
    %1016 = vmatprep.subr.bf16.mxu0 %v515
    %1017 = vmatpush1.bf16.msra.mxu0 %v514
    %1018 = vmatprep.subr.bf16.mxu0 %v519
    %1019 = vmatpush1.bf16.msra.mxu0 %v518
    %1020 = vmatprep.subr.bf16.mxu0 %v523
    %1021 = vmatpush1.bf16.msra.mxu0 %v522
    %1022 = vmatprep.subr.bf16.mxu0 %v527
    %1023 = vmatpush1.bf16.msra.mxu0 %v526
    %1024 = vmatprep.subr.bf16.mxu0 %v531
    %1025 = vmatpush1.bf16.msra.mxu0 %v530
    %1026 = vmatprep.subr.bf16.mxu0 0
    %1027 = vmatpush1.bf16.msra.mxu0 0
    %1028 = vmatprep.subr.bf16.mxu0 0
    %1029 = vmatpush1.bf16.msra.mxu0 0
    %1030 = vmatprep.subr.bf16.mxu0 0
    %1031 = vmatpush1.bf16.msra.mxu0 0
    %1032 = vmatprep.subr.bf16.mxu0 0
    %1033 = vmatpush1.bf16.msra.mxu0 0
    %1034 = vmatprep.subr.bf16.mxu0 0
    %1035 = vmatpush1.bf16.msra.mxu0 0
    %1036 = vmatprep.subr.bf16.mxu0 0
    %1037 = vmatpush1.bf16.msra.mxu0 0
    %1038 = vmatprep.subr.bf16.mxu0 0
    %1039 = vmatpush1.bf16.msra.mxu0 0
    %1040 = vmatprep.subr.bf16.mxu0 0
    %1041 = vmatpush1.bf16.msra.mxu0 0
    %1042 = vmatprep.mubr.bf16.mxu0 0
    %1043 = vmatmul.mubr.bf16.gmra.mrb[0].mxu0 %v1009
    %v1044 = vpop.f32.mrb[0].mxu0
    %v1045 = vadd.f32 0.0, %v1044
    %v1046 = vpop.f32.mrb[0].mxu0
    %v1047 = vadd.f32 0.0, %v1046
    %v1048 = vpop.f32.mrb[0].mxu0
    %v1049 = vpop.f32.mrb[0].mxu0
    %1050 = vdwg.mxu0
    %1051 = vmatprep.subr.bf16.mxu0 %v505
    %1052 = vmatpush1.bf16.msra.mxu0 %v504
    %1053 = vmatprep.subr.bf16.mxu0 %v509
    %1054 = vmatpush1.bf16.msra.mxu0 %v508
    %1055 = vmatprep.subr.bf16.mxu0 %v513
    %1056 = vmatpush1.bf16.msra.mxu0 %v512
    %1057 = vmatprep.subr.bf16.mxu0 %v517
    %1058 = vmatpush1.bf16.msra.mxu0 %v516
    %1059 = vmatprep.subr.bf16.mxu0 %v521
    %1060 = vmatpush1.bf16.msra.mxu0 %v520
    %1061 = vmatprep.subr.bf16.mxu0 %v525
    %1062 = vmatpush1.bf16.msra.mxu0 %v524
    %1063 = vmatprep.subr.bf16.mxu0 %v529
    %1064 = vmatpush1.bf16.msra.mxu0 %v528
    %1065 = vmatprep.subr.bf16.mxu0 %v533
    %1066 = vmatpush1.bf16.msra.mxu0 %v532
    %1067 = vmatprep.subr.bf16.mxu0 0
    %1068 = vmatpush1.bf16.msra.mxu0 0
    %1069 = vmatprep.subr.bf16.mxu0 0
    %1070 = vmatpush1.bf16.msra.mxu0 0
    %1071 = vmatprep.subr.bf16.mxu0 0
    %1072 = vmatpush1.bf16.msra.mxu0 0
    %1073 = vmatprep.subr.bf16.mxu0 0
    %1074 = vmatpush1.bf16.msra.mxu0 0
    %1075 = vmatprep.subr.bf16.mxu0 0
    %1076 = vmatpush1.bf16.msra.mxu0 0
    %1077 = vmatprep.subr.bf16.mxu0 0
    %1078 = vmatpush1.bf16.msra.mxu0 0
    %1079 = vmatprep.subr.bf16.mxu0 0
    %1080 = vmatpush1.bf16.msra.mxu0 0
    %1081 = vmatprep.subr.bf16.mxu0 0
    %1082 = vmatpush1.bf16.msra.mxu0 0
    %1083 = vmatprep.mubr.bf16.mxu0 0
    %1084 = vmatmul.mubr.bf16.gmra.mrb[0].mxu0 %v1009
    %v1085 = vpop.f32.mrb[0].mxu0
    %v1086 = vadd.f32 0.0, %v1085
    %v1087 = vpop.f32.mrb[0].mxu0
    %v1088 = vadd.f32 0.0, %v1087
    %v1089 = vpop.f32.mrb[0].mxu0
    %v1090 = vpop.f32.mrb[0].mxu0
    %1091 = vdwg.mxu0
    %v1092 = vadd.f32 %v256, %v1045
    %v1093 = vadd.f32 %v257, %v1047
    %v1094 = vadd.f32 %v258, %v1086
    %v1095 = vadd.f32 %v259, %v1088
    %v1096 = vxor.u32 %v1092, 2147483648
    %v1097 = vmul.f32 %v1096, 1.442695
    %v1098 = vpow.pop %v1097
    %v1099 = vadd.f32 %v1098, 1.0
    %v1100 = vrcp.pop %v1099
    %v1101 = vmul.f32 1.0, %v1100
    %v1102 = vxor.u32 %v1093, 2147483648
    %v1103 = vmul.f32 %v1102, 1.442695
    %v1104 = vpow.pop %v1103
    %v1105 = vadd.f32 %v1104, 1.0
    %v1106 = vrcp.pop %v1105
    %v1107 = vmul.f32 1.0, %v1106
    %v1108 = vtanh.pop %v1094
    %v1109 = vxor.u32 %v1095, 2147483648
    %v1110 = vmul.f32 %v1109, 1.442695
    %v1111 = vpow.pop %v1110
    %v1112 = vadd.f32 %v1111, 1.0
    %v1113 = vrcp.pop %v1112
    %v1114 = vmul.f32 1.0, %v1113
    %v1115 = vmul.f32 %v1107, %v1006
    %v1116 = vmul.f32 %v1101, %v1108
    %v1117 = vadd.f32 %v1115, %v1116
    %v1118 = vtanh.pop %v1117
    %v1119 = vmul.f32 %v1114, %v1118
    %v1120 = vpack.c.bf16 %v1119, %v1119
    %1121 = vmatprep.subr.bf16.mxu0 %v503
    %1122 = vmatpush1.bf16.msra.mxu0 %v502
    %1123 = vmatprep.subr.bf16.mxu0 %v507
    %1124 = vmatpush1.bf16.msra.mxu0 %v506
    %1125 = vmatprep.subr.bf16.mxu0 %v511
    %1126 = vmatpush1.bf16.msra.mxu0 %v510
    %1127 = vmatprep.subr.bf16.mxu0 %v515
    %1128 = vmatpush1.bf16.msra.mxu0 %v514
    %1129 = vmatprep.subr.bf16.mxu0 %v519
    %1130 = vmatpush1.bf16.msra.mxu0 %v518
    %1131 = vmatprep.subr.bf16.mxu0 %v523
    %1132 = vmatpush1.bf16.msra.mxu0 %v522
    %1133 = vmatprep.subr.bf16.mxu0 %v527
    %1134 = vmatpush1.bf16.msra.mxu0 %v526
    %1135 = vmatprep.subr.bf16.mxu0 %v531
    %1136 = vmatpush1.bf16.msra.mxu0 %v530
    %1137 = vmatprep.subr.bf16.mxu0 0
    %1138 = vmatpush1.bf16.msra.mxu0 0
    %1139 = vmatprep.subr.bf16.mxu0 0
    %1140 = vmatpush1.bf16.msra.mxu0 0
    %1141 = vmatprep.subr.bf16.mxu0 0
    %1142 = vmatpush1.bf16.msra.mxu0 0
    %1143 = vmatprep.subr.bf16.mxu0 0
    %1144 = vmatpush1.bf16.msra.mxu0 0
    %1145 = vmatprep.subr.bf16.mxu0 0
    %1146 = vmatpush1.bf16.msra.mxu0 0
    %1147 = vmatprep.subr.bf16.mxu0 0
    %1148 = vmatpush1.bf16.msra.mxu0 0
    %1149 = vmatprep.subr.bf16.mxu0 0
    %1150 = vmatpush1.bf16.msra.mxu0 0
    %1151 = vmatprep.subr.bf16.mxu0 0
    %1152 = vmatpush1.bf16.msra.mxu0 0
    %1153 = vmatprep.mubr.bf16.mxu0 0
    %1154 = vmatmul.mubr.bf16.gmra.mrb[0].mxu0 %v1120
    %v1155 = vpop.f32.mrb[0].mxu0
    %v1156 = vadd.f32 0.0, %v1155
    %v1157 = vpop.f32.mrb[0].mxu0
    %v1158 = vadd.f32 0.0, %v1157
    %v1159 = vpop.f32.mrb[0].mxu0
    %v1160 = vpop.f32.mrb[0].mxu0
    %1161 = vdwg.mxu0
    %1162 = vmatprep.subr.bf16.mxu0 %v505
    %1163 = vmatpush1.bf16.msra.mxu0 %v504
    %1164 = vmatprep.subr.bf16.mxu0 %v509
    %1165 = vmatpush1.bf16.msra.mxu0 %v508
    %1166 = vmatprep.subr.bf16.mxu0 %v513
    %1167 = vmatpush1.bf16.msra.mxu0 %v512
    %1168 = vmatprep.subr.bf16.mxu0 %v517
    %1169 = vmatpush1.bf16.msra.mxu0 %v516
    %1170 = vmatprep.subr.bf16.mxu0 %v521
    %1171 = vmatpush1.bf16.msra.mxu0 %v520
    %1172 = vmatprep.subr.bf16.mxu0 %v525
    %1173 = vmatpush1.bf16.msra.mxu0 %v524
    %1174 = vmatprep.subr.bf16.mxu0 %v529
    %1175 = vmatpush1.bf16.msra.mxu0 %v528
    %1176 = vmatprep.subr.bf16.mxu0 %v533
    %1177 = vmatpush1.bf16.msra.mxu0 %v532
    %1178 = vmatprep.subr.bf16.mxu0 0
    %1179 = vmatpush1.bf16.msra.mxu0 0
    %1180 = vmatprep.subr.bf16.mxu0 0
    %1181 = vmatpush1.bf16.msra.mxu0 0
    %1182 = vmatprep.subr.bf16.mxu0 0
    %1183 = vmatpush1.bf16.msra.mxu0 0
    %1184 = vmatprep.subr.bf16.mxu0 0
    %1185 = vmatpush1.bf16.msra.mxu0 0
    %1186 = vmatprep.subr.bf16.mxu0 0
    %1187 = vmatpush1.bf16.msra.mxu0 0
    %1188 = vmatprep.subr.bf16.mxu0 0
    %1189 = vmatpush1.bf16.msra.mxu0 0
    %1190 = vmatprep.subr.bf16.mxu0 0
    %1191 = vmatpush1.bf16.msra.mxu0 0
    %1192 = vmatprep.subr.bf16.mxu0 0
    %1193 = vmatpush1.bf16.msra.mxu0 0
    %1194 = vmatprep.mubr.bf16.mxu0 0
    %1195 = vmatmul.mubr.bf16.gmra.mrb[0].mxu0 %v1120
    %v1196 = vpop.f32.mrb[0].mxu0
    %v1197 = vadd.f32 0.0, %v1196
    %v1198 = vpop.f32.mrb[0].mxu0
    %v1199 = vadd.f32 0.0, %v1198
    %v1200 = vpop.f32.mrb[0].mxu0
    %v1201 = vpop.f32.mrb[0].mxu0
    %1202 = vdwg.mxu0
    %v1203 = vadd.f32 %v260, %v1156
    %v1204 = vadd.f32 %v261, %v1158
    %v1205 = vadd.f32 %v262, %v1197
    %v1206 = vadd.f32 %v263, %v1199
    %v1207 = vxor.u32 %v1203, 2147483648
    %v1208 = vmul.f32 %v1207, 1.442695
    %v1209 = vpow.pop %v1208
    %v1210 = vadd.f32 %v1209, 1.0
    %v1211 = vrcp.pop %v1210
    %v1212 = vmul.f32 1.0, %v1211
    %v1213 = vxor.u32 %v1204, 2147483648
    %v1214 = vmul.f32 %v1213, 1.442695
    %v1215 = vpow.pop %v1214
    %v1216 = vadd.f32 %v1215, 1.0
    %v1217 = vrcp.pop %v1216
    %v1218 = vmul.f32 1.0, %v1217
    %v1219 = vtanh.pop %v1205
    %v1220 = vxor.u32 %v1206, 2147483648
    %v1221 = vmul.f32 %v1220, 1.442695
    %v1222 = vpow.pop %v1221
    %v1223 = vadd.f32 %v1222, 1.0
    %v1224 = vrcp.pop %v1223
    %v1225 = vmul.f32 1.0, %v1224
    %v1226 = vmul.f32 %v1218, %v1117
    %v1227 = vmul.f32 %v1212, %v1219
    %v1228 = vadd.f32 %v1226, %v1227
    %v1229 = vtanh.pop %v1228
    %v1230 = vmul.f32 %v1225, %v1229
    %v1231 = vpack.c.bf16 %v1230, %v1230
    %1232 = vmatprep.subr.bf16.mxu0 %v503
    %1233 = vmatpush1.bf16.msra.mxu0 %v502
    %1234 = vmatprep.subr.bf16.mxu0 %v507
    %1235 = vmatpush1.bf16.msra.mxu0 %v506
    %1236 = vmatprep.subr.bf16.mxu0 %v511
    %1237 = vmatpush1.bf16.msra.mxu0 %v510
    %1238 = vmatprep.subr.bf16.mxu0 %v515
    %1239 = vmatpush1.bf16.msra.mxu0 %v514
    %1240 = vmatprep.subr.bf16.mxu0 %v519
    %1241 = vmatpush1.bf16.msra.mxu0 %v518
    %1242 = vmatprep.subr.bf16.mxu0 %v523
    %1243 = vmatpush1.bf16.msra.mxu0 %v522
    %1244 = vmatprep.subr.bf16.mxu0 %v527
    %1245 = vmatpush1.bf16.msra.mxu0 %v526
    %1246 = vmatprep.subr.bf16.mxu0 %v531
    %1247 = vmatpush1.bf16.msra.mxu0 %v530
    %1248 = vmatprep.subr.bf16.mxu0 0
    %1249 = vmatpush1.bf16.msra.mxu0 0
    %1250 = vmatprep.subr.bf16.mxu0 0
    %1251 = vmatpush1.bf16.msra.mxu0 0
    %1252 = vmatprep.subr.bf16.mxu0 0
    %1253 = vmatpush1.bf16.msra.mxu0 0
    %1254 = vmatprep.subr.bf16.mxu0 0
    %1255 = vmatpush1.bf16.msra.mxu0 0
    %1256 = vmatprep.subr.bf16.mxu0 0
    %1257 = vmatpush1.bf16.msra.mxu0 0
    %1258 = vmatprep.subr.bf16.mxu0 0
    %1259 = vmatpush1.bf16.msra.mxu0 0
    %1260 = vmatprep.subr.bf16.mxu0 0
    %1261 = vmatpush1.bf16.msra.mxu0 0
    %1262 = vmatprep.subr.bf16.mxu0 0
    %1263 = vmatpush1.bf16.msra.mxu0 0
    %1264 = vmatprep.mubr.bf16.mxu0 0
    %1265 = vmatmul.mubr.bf16.gmra.mrb[0].mxu0 %v1231
    %v1266 = vpop.f32.mrb[0].mxu0
    %v1267 = vadd.f32 0.0, %v1266
    %v1268 = vpop.f32.mrb[0].mxu0
    %v1269 = vadd.f32 0.0, %v1268
    %v1270 = vpop.f32.mrb[0].mxu0
    %v1271 = vpop.f32.mrb[0].mxu0
    %1272 = vdwg.mxu0
    %1273 = vmatprep.subr.bf16.mxu0 %v505
    %1274 = vmatpush1.bf16.msra.mxu0 %v504
    %1275 = vmatprep.subr.bf16.mxu0 %v509
    %1276 = vmatpush1.bf16.msra.mxu0 %v508
    %1277 = vmatprep.subr.bf16.mxu0 %v513
    %1278 = vmatpush1.bf16.msra.mxu0 %v512
    %1279 = vmatprep.subr.bf16.mxu0 %v517
    %1280 = vmatpush1.bf16.msra.mxu0 %v516
    %1281 = vmatprep.subr.bf16.mxu0 %v521
    %1282 = vmatpush1.bf16.msra.mxu0 %v520
    %1283 = vmatprep.subr.bf16.mxu0 %v525
    %1284 = vmatpush1.bf16.msra.mxu0 %v524
    %1285 = vmatprep.subr.bf16.mxu0 %v529
    %1286 = vmatpush1.bf16.msra.mxu0 %v528
    %1287 = vmatprep.subr.bf16.mxu0 %v533
    %1288 = vmatpush1.bf16.msra.mxu0 %v532
    %1289 = vmatprep.subr.bf16.mxu0 0
    %1290 = vmatpush1.bf16.msra.mxu0 0
    %1291 = vmatprep.subr.bf16.mxu0 0
    %1292 = vmatpush1.bf16.msra.mxu0 0
    %1293 = vmatprep.subr.bf16.mxu0 0
    %1294 = vmatpush1.bf16.msra.mxu0 0
    %1295 = vmatprep.subr.bf16.mxu0 0
    %1296 = vmatpush1.bf16.msra.mxu0 0
    %1297 = vmatprep.subr.bf16.mxu0 0
    %1298 = vmatpush1.bf16.msra.mxu0 0
    %1299 = vmatprep.subr.bf16.mxu0 0
    %1300 = vmatpush1.bf16.msra.mxu0 0
    %1301 = vmatprep.subr.bf16.mxu0 0
    %1302 = vmatpush1.bf16.msra.mxu0 0
    %1303 = vmatprep.subr.bf16.mxu0 0
    %1304 = vmatpush1.bf16.msra.mxu0 0
    %1305 = vmatprep.mubr.bf16.mxu0 0
    %1306 = vmatmul.mubr.bf16.gmra.mrb[0].mxu0 %v1231
    %v1307 = vpop.f32.mrb[0].mxu0
    %v1308 = vadd.f32 0.0, %v1307
    %v1309 = vpop.f32.mrb[0].mxu0
    %v1310 = vadd.f32 0.0, %v1309
    %v1311 = vpop.f32.mrb[0].mxu0
    %v1312 = vpop.f32.mrb[0].mxu0
    %1313 = vdwg.mxu0
    %v1314 = vadd.f32 %v264, %v1267
    %v1315 = vadd.f32 %v265, %v1269
    %v1316 = vadd.f32 %v266, %v1308
    %v1317 = vadd.f32 %v267, %v1310
    %v1318 = vxor.u32 %v1314, 2147483648
    %v1319 = vmul.f32 %v1318, 1.442695
    %v1320 = vpow.pop %v1319
    %v1321 = vadd.f32 %v1320, 1.0
    %v1322 = vrcp.pop %v1321
    %v1323 = vmul.f32 1.0, %v1322
    %v1324 = vxor.u32 %v1315, 2147483648
    %v1325 = vmul.f32 %v1324, 1.442695
    %v1326 = vpow.pop %v1325
    %v1327 = vadd.f32 %v1326, 1.0
    %v1328 = vrcp.pop %v1327
    %v1329 = vmul.f32 1.0, %v1328
    %v1330 = vtanh.pop %v1316
    %v1331 = vxor.u32 %v1317, 2147483648
    %v1332 = vmul.f32 %v1331, 1.442695
    %v1333 = vpow.pop %v1332
    %v1334 = vadd.f32 %v1333, 1.0
    %v1335 = vrcp.pop %v1334
    %v1336 = vmul.f32 1.0, %v1335
    %v1337 = vmul.f32 %v1329, %v1228
    %v1338 = vmul.f32 %v1323, %v1330
    %v1339 = vadd.f32 %v1337, %v1338
    %v1340 = vtanh.pop %v1339
    %v1341 = vmul.f32 %v1336, %v1340
    %v1342 = vpack.c.bf16 %v1341, %v1341
    %v1375 = vunpack.c.l.b16 %v98
    %v1376 = vunpack.c.h.b16 %v98
    %v1377 = vunpack.c.l.b16 %v99
    %v1378 = vunpack.c.h.b16 %v99
    %v1379 = vunpack.c.l.b16 %v100
    %v1380 = vunpack.c.h.b16 %v100
    %v1381 = vunpack.c.l.b16 %v101
    %v1382 = vunpack.c.h.b16 %v101
    %v1383 = vunpack.c.l.b16 %v102
    %v1384 = vunpack.c.h.b16 %v102
    %v1385 = vunpack.c.l.b16 %v103
    %v1386 = vunpack.c.h.b16 %v103
    %v1387 = vunpack.c.l.b16 %v104
    %v1388 = vunpack.c.h.b16 %v104
    %v1389 = vunpack.c.l.b16 %v105
    %v1390 = vunpack.c.h.b16 %v105
    %v1391 = vunpack.c.l.b16 %v106
    %v1392 = vunpack.c.h.b16 %v106
    %v1393 = vunpack.c.l.b16 %v107
    %v1394 = vunpack.c.h.b16 %v107
    %v1395 = vunpack.c.l.b16 %v108
    %v1396 = vunpack.c.h.b16 %v108
    %v1397 = vunpack.c.l.b16 %v109
    %v1398 = vunpack.c.h.b16 %v109
    %v1399 = vunpack.c.l.b16 %v110
    %v1400 = vunpack.c.h.b16 %v110
    %v1401 = vunpack.c.l.b16 %v111
    %v1402 = vunpack.c.h.b16 %v111
    %v1403 = vunpack.c.l.b16 %v112
    %v1404 = vunpack.c.h.b16 %v112
    %v1405 = vunpack.c.l.b16 %v113
    %v1406 = vunpack.c.h.b16 %v113
    %v1407 = vunpack.c.l.b16 %v114
    %v1408 = vunpack.c.h.b16 %v114
    %v1409 = vunpack.c.l.b16 %v115
    %v1410 = vunpack.c.h.b16 %v115
    %v1411 = vunpack.c.l.b16 %v116
    %v1412 = vunpack.c.h.b16 %v116
    %v1413 = vunpack.c.l.b16 %v117
    %v1414 = vunpack.c.h.b16 %v117
    %v1415 = vunpack.c.l.b16 %v118
    %v1416 = vunpack.c.h.b16 %v118
    %v1417 = vunpack.c.l.b16 %v119
    %v1418 = vunpack.c.h.b16 %v119
    %v1419 = vunpack.c.l.b16 %v120
    %v1420 = vunpack.c.h.b16 %v120
    %v1421 = vunpack.c.l.b16 %v121
    %v1422 = vunpack.c.h.b16 %v121
    %v1423 = vunpack.c.l.b16 %v122
    %v1424 = vunpack.c.h.b16 %v122
    %v1425 = vunpack.c.l.b16 %v123
    %v1426 = vunpack.c.h.b16 %v123
    %v1427 = vunpack.c.l.b16 %v124
    %v1428 = vunpack.c.h.b16 %v124
    %v1429 = vunpack.c.l.b16 %v125
    %v1430 = vunpack.c.h.b16 %v125
    %v1431 = vunpack.c.l.b16 %v126
    %v1432 = vunpack.c.h.b16 %v126
    %v1433 = vunpack.c.l.b16 %v127
    %v1434 = vunpack.c.h.b16 %v127
    %v1435 = vunpack.c.l.b16 %v128
    %v1436 = vunpack.c.h.b16 %v128
    %v1437 = vunpack.c.l.b16 %v129
    %v1438 = vunpack.c.h.b16 %v129
    %v1439 = vpack.c.b16 %v1379, %v1375
    %v1440 = vpack.c.b16 %v1380, %v1376
    %v1441 = vpack.c.b16 %v1381, %v1377
    %v1442 = vpack.c.b16 %v1382, %v1378
    %v1443 = vpack.c.b16 %v1387, %v1383
    %v1444 = vpack.c.b16 %v1388, %v1384
    %v1445 = vpack.c.b16 %v1389, %v1385
    %v1446 = vpack.c.b16 %v1390, %v1386
    %v1447 = vpack.c.b16 %v1395, %v1391
    %v1448 = vpack.c.b16 %v1396, %v1392
    %v1449 = vpack.c.b16 %v1397, %v1393
    %v1450 = vpack.c.b16 %v1398, %v1394
    %v1451 = vpack.c.b16 %v1403, %v1399
    %v1452 = vpack.c.b16 %v1404, %v1400
    %v1453 = vpack.c.b16 %v1405, %v1401
    %v1454 = vpack.c.b16 %v1406, %v1402
    %v1455 = vpack.c.b16 %v1411, %v1407
    %v1456 = vpack.c.b16 %v1412, %v1408
    %v1457 = vpack.c.b16 %v1413, %v1409
    %v1458 = vpack.c.b16 %v1414, %v1410
    %v1459 = vpack.c.b16 %v1419, %v1415
    %v1460 = vpack.c.b16 %v1420, %v1416
    %v1461 = vpack.c.b16 %v1421, %v1417
    %v1462 = vpack.c.b16 %v1422, %v1418
    %v1463 = vpack.c.b16 %v1427, %v1423
    %v1464 = vpack.c.b16 %v1428, %v1424
    %v1465 = vpack.c.b16 %v1429, %v1425
    %v1466 = vpack.c.b16 %v1430, %v1426
    %v1467 = vpack.c.b16 %v1435, %v1431
    %v1468 = vpack.c.b16 %v1436, %v1432
    %v1469 = vpack.c.b16 %v1437, %v1433
    %v1470 = vpack.c.b16 %v1438, %v1434
    %1503 = vmatprep.subr.bf16.mxu0 %v1440
    %1504 = vmatpush1.bf16.msra.mxu0 %v1439
    %1505 = vmatprep.subr.bf16.mxu0 %v1444
    %1506 = vmatpush1.bf16.msra.mxu0 %v1443
    %1507 = vmatprep.subr.bf16.mxu0 %v1448
    %1508 = vmatpush1.bf16.msra.mxu0 %v1447
    %1509 = vmatprep.subr.bf16.mxu0 %v1452
    %1510 = vmatpush1.bf16.msra.mxu0 %v1451
    %1511 = vmatprep.subr.bf16.mxu0 %v1456
    %1512 = vmatpush1.bf16.msra.mxu0 %v1455
    %1513 = vmatprep.subr.bf16.mxu0 %v1460
    %1514 = vmatpush1.bf16.msra.mxu0 %v1459
    %1515 = vmatprep.subr.bf16.mxu0 %v1464
    %1516 = vmatpush1.bf16.msra.mxu0 %v1463
    %1517 = vmatprep.subr.bf16.mxu0 %v1468
    %1518 = vmatpush1.bf16.msra.mxu0 %v1467
    %1519 = vmatprep.subr.bf16.mxu0 0
    %1520 = vmatpush1.bf16.msra.mxu0 0
    %1521 = vmatprep.subr.bf16.mxu0 0
    %1522 = vmatpush1.bf16.msra.mxu0 0
    %1523 = vmatprep.subr.bf16.mxu0 0
    %1524 = vmatpush1.bf16.msra.mxu0 0
    %1525 = vmatprep.subr.bf16.mxu0 0
    %1526 = vmatpush1.bf16.msra.mxu0 0
    %1527 = vmatprep.subr.bf16.mxu0 0
    %1528 = vmatpush1.bf16.msra.mxu0 0
    %1529 = vmatprep.subr.bf16.mxu0 0
    %1530 = vmatpush1.bf16.msra.mxu0 0
    %1531 = vmatprep.subr.bf16.mxu0 0
    %1532 = vmatpush1.bf16.msra.mxu0 0
    %1533 = vmatprep.subr.bf16.mxu0 0
    %1534 = vmatpush1.bf16.msra.mxu0 0
    %1535 = vmatprep.mubr.bf16.mxu0 0
    %1536 = vmatmul.mubr.bf16.gmra.mrb[0].mxu0 %v1342
    %v1537 = vpop.f32.mrb[0].mxu0
    %v1538 = vadd.f32 0.0, %v1537
    %v1539 = vpop.f32.mrb[0].mxu0
    %v1540 = vadd.f32 0.0, %v1539
    %v1541 = vpop.f32.mrb[0].mxu0
    %v1542 = vpop.f32.mrb[0].mxu0
    %1543 = vdwg.mxu0
    %1544 = vmatprep.subr.bf16.mxu0 %v1442
    %1545 = vmatpush1.bf16.msra.mxu0 %v1441
    %1546 = vmatprep.subr.bf16.mxu0 %v1446
    %1547 = vmatpush1.bf16.msra.mxu0 %v1445
    %1548 = vmatprep.subr.bf16.mxu0 %v1450
    %1549 = vmatpush1.bf16.msra.mxu0 %v1449
    %1550 = vmatprep.subr.bf16.mxu0 %v1454
    %1551 = vmatpush1.bf16.msra.mxu0 %v1453
    %1552 = vmatprep.subr.bf16.mxu0 %v1458
    %1553 = vmatpush1.bf16.msra.mxu0 %v1457
    %1554 = vmatprep.subr.bf16.mxu0 %v1462
    %1555 = vmatpush1.bf16.msra.mxu0 %v1461
    %1556 = vmatprep.subr.bf16.mxu0 %v1466
    %1557 = vmatpush1.bf16.msra.mxu0 %v1465
    %1558 = vmatprep.subr.bf16.mxu0 %v1470
    %1559 = vmatpush1.bf16.msra.mxu0 %v1469
    %1560 = vmatprep.subr.bf16.mxu0 0
    %1561 = vmatpush1.bf16.msra.mxu0 0
    %1562 = vmatprep.subr.bf16.mxu0 0
    %1563 = vmatpush1.bf16.msra.mxu0 0
    %1564 = vmatprep.subr.bf16.mxu0 0
    %1565 = vmatpush1.bf16.msra.mxu0 0
    %1566 = vmatprep.subr.bf16.mxu0 0
    %1567 = vmatpush1.bf16.msra.mxu0 0
    %1568 = vmatprep.subr.bf16.mxu0 0
    %1569 = vmatpush1.bf16.msra.mxu0 0
    %1570 = vmatprep.subr.bf16.mxu0 0
    %1571 = vmatpush1.bf16.msra.mxu0 0
    %1572 = vmatprep.subr.bf16.mxu0 0
    %1573 = vmatpush1.bf16.msra.mxu0 0
    %1574 = vmatprep.subr.bf16.mxu0 0
    %1575 = vmatpush1.bf16.msra.mxu0 0
    %1576 = vmatprep.mubr.bf16.mxu0 0
    %1577 = vmatmul.mubr.bf16.gmra.mrb[0].mxu0 %v1342
    %v1578 = vpop.f32.mrb[0].mxu0
    %v1579 = vadd.f32 0.0, %v1578
    %v1580 = vpop.f32.mrb[0].mxu0
    %v1581 = vadd.f32 0.0, %v1580
    %v1582 = vpop.f32.mrb[0].mxu0
    %v1583 = vpop.f32.mrb[0].mxu0
    %1584 = vdwg.mxu0
    %v1585 = vadd.f32 %v343, %v1538
    %v1586 = vadd.f32 %v344, %v1540
    %v1587 = vadd.f32 %v345, %v1579
    %v1588 = vadd.f32 %v346, %v1581
    %v1589 = vxor.u32 %v1585, 2147483648
    %v1590 = vmul.f32 %v1589, 1.442695
    %v1591 = vpow.pop %v1590
    %v1592 = vadd.f32 %v1591, 1.0
    %v1593 = vrcp.pop %v1592
    %v1594 = vmul.f32 1.0, %v1593
    %v1595 = vxor.u32 %v1586, 2147483648
    %v1596 = vmul.f32 %v1595, 1.442695
    %v1597 = vpow.pop %v1596
    %v1598 = vadd.f32 %v1597, 1.0
    %v1599 = vrcp.pop %v1598
    %v1600 = vmul.f32 1.0, %v1599
    %v1601 = vtanh.pop %v1587
    %v1602 = vxor.u32 %v1588, 2147483648
    %v1603 = vmul.f32 %v1602, 1.442695
    %v1604 = vpow.pop %v1603
    %v1605 = vadd.f32 %v1604, 1.0
    %v1606 = vrcp.pop %v1605
    %v1607 = vmul.f32 1.0, %v1606
    %v1608 = vmul.f32 %v1600, %v1339
    %v1609 = vmul.f32 %v1594, %v1601
    %v1610 = vadd.f32 %v1608, %v1609
    %v1611 = vtanh.pop %v1610
    %v1612 = vmul.f32 %v1607, %v1611
    %v1613 = vlaneseq
    %v1614 = vshrl.u32 %v1613, 7
    %v1615 = vsub.s32 4, %v1614
    %v1616 = vrot.slane %v130, %v1615
    %v1617 = vmul.f32 %v1612, %v1616
    %vm1618 = vcmask 1041408
    %v1619 = vsel %vm1618, %v1617, 0.0
    %1620 = vadd.xlane.f32.xlu0 %v1619
    %v1621 = vpop.xlane.xlu0 %1620
    %v1622 = vlaneseq
    %v1623 = vshrl.u32 %v1622, 7
    %v1624 = vsub.s32 5, %v1623
    %v1625 = vrot.slane %v130, %v1624
    %v1626 = vadd.f32 %v1621, %v1625
    %1628 = vset.pattern.permute.xlu0 0
    %1629 = vperm.xlu0 %1628, %v1626
    %v1630 = vpop.permute.xlu0 %1629
    %v1632 = vmul.f32 %v1630, %v286
    %v1633 = vmul.f32 %v1630, %v290
    %v1634 = vmul.f32 %v1630, %v294
    %v1635 = vmul.f32 %v1630, %v298
    %v1636 = vadd.f32 %v1632, %v314
    %v1637 = vadd.f32 %v1633, %v318
    %v1638 = vadd.f32 %v1634, %v322
    %v1639 = vadd.f32 %v1635, %v326
    %v1641 = vlaneseq
    %v1642 = vshrl.u32 %v1641, 7
    %v1643 = vsub.s32 0, %v1642
    %v1644 = vrot.slane %v386, %v1643
    %1645 = vset.pattern.permute.xlu0 0
    %1646 = vperm.xlu0 %1645, %v1644
    %v1647 = vpop.permute.xlu0 %1646
    %v1649 = vmul.f32 %v1647, %v1636
    %v1650 = vmul.f32 %v1647, %v1637
    %v1651 = vmul.f32 %v1647, %v1638
    %v1652 = vmul.f32 %v1647, %v1639
    %v1653 = vadd.f32 %v374, %v1649
    %v1654 = vadd.f32 %v375, %v1650
    %v1655 = vadd.f32 %v376, %v1651
    %v1656 = vadd.f32 %v377, %v1652
    %v1657 = vpack.c.bf16 %v1612, %v1612
    %1658 = vmatprep.subr.bf16.mxu0 %v1440
    %1659 = vmatpush1.bf16.msra.mxu0 %v1439
    %1660 = vmatprep.subr.bf16.mxu0 %v1444
    %1661 = vmatpush1.bf16.msra.mxu0 %v1443
    %1662 = vmatprep.subr.bf16.mxu0 %v1448
    %1663 = vmatpush1.bf16.msra.mxu0 %v1447
    %1664 = vmatprep.subr.bf16.mxu0 %v1452
    %1665 = vmatpush1.bf16.msra.mxu0 %v1451
    %1666 = vmatprep.subr.bf16.mxu0 %v1456
    %1667 = vmatpush1.bf16.msra.mxu0 %v1455
    %1668 = vmatprep.subr.bf16.mxu0 %v1460
    %1669 = vmatpush1.bf16.msra.mxu0 %v1459
    %1670 = vmatprep.subr.bf16.mxu0 %v1464
    %1671 = vmatpush1.bf16.msra.mxu0 %v1463
    %1672 = vmatprep.subr.bf16.mxu0 %v1468
    %1673 = vmatpush1.bf16.msra.mxu0 %v1467
    %1674 = vmatprep.subr.bf16.mxu0 0
    %1675 = vmatpush1.bf16.msra.mxu0 0
    %1676 = vmatprep.subr.bf16.mxu0 0
    %1677 = vmatpush1.bf16.msra.mxu0 0
    %1678 = vmatprep.subr.bf16.mxu0 0
    %1679 = vmatpush1.bf16.msra.mxu0 0
    %1680 = vmatprep.subr.bf16.mxu0 0
    %1681 = vmatpush1.bf16.msra.mxu0 0
    %1682 = vmatprep.subr.bf16.mxu0 0
    %1683 = vmatpush1.bf16.msra.mxu0 0
    %1684 = vmatprep.subr.bf16.mxu0 0
    %1685 = vmatpush1.bf16.msra.mxu0 0
    %1686 = vmatprep.subr.bf16.mxu0 0
    %1687 = vmatpush1.bf16.msra.mxu0 0
    %1688 = vmatprep.subr.bf16.mxu0 0
    %1689 = vmatpush1.bf16.msra.mxu0 0
    %1690 = vmatprep.mubr.bf16.mxu0 0
    %1691 = vmatmul.mubr.bf16.gmra.mrb[0].mxu0 %v1657
    %v1692 = vpop.f32.mrb[0].mxu0
    %v1693 = vadd.f32 0.0, %v1692
    %v1694 = vpop.f32.mrb[0].mxu0
    %v1695 = vadd.f32 0.0, %v1694
    %v1696 = vpop.f32.mrb[0].mxu0
    %v1697 = vpop.f32.mrb[0].mxu0
    %1698 = vdwg.mxu0
    %1699 = vmatprep.subr.bf16.mxu0 %v1442
    %1700 = vmatpush1.bf16.msra.mxu0 %v1441
    %1701 = vmatprep.subr.bf16.mxu0 %v1446
    %1702 = vmatpush1.bf16.msra.mxu0 %v1445
    %1703 = vmatprep.subr.bf16.mxu0 %v1450
    %1704 = vmatpush1.bf16.msra.mxu0 %v1449
    %1705 = vmatprep.subr.bf16.mxu0 %v1454
    %1706 = vmatpush1.bf16.msra.mxu0 %v1453
    %1707 = vmatprep.subr.bf16.mxu0 %v1458
    %1708 = vmatpush1.bf16.msra.mxu0 %v1457
    %1709 = vmatprep.subr.bf16.mxu0 %v1462
    %1710 = vmatpush1.bf16.msra.mxu0 %v1461
    %1711 = vmatprep.subr.bf16.mxu0 %v1466
    %1712 = vmatpush1.bf16.msra.mxu0 %v1465
    %1713 = vmatprep.subr.bf16.mxu0 %v1470
    %1714 = vmatpush1.bf16.msra.mxu0 %v1469
    %1715 = vmatprep.subr.bf16.mxu0 0
    %1716 = vmatpush1.bf16.msra.mxu0 0
    %1717 = vmatprep.subr.bf16.mxu0 0
    %1718 = vmatpush1.bf16.msra.mxu0 0
    %1719 = vmatprep.subr.bf16.mxu0 0
    %1720 = vmatpush1.bf16.msra.mxu0 0
    %1721 = vmatprep.subr.bf16.mxu0 0
    %1722 = vmatpush1.bf16.msra.mxu0 0
    %1723 = vmatprep.subr.bf16.mxu0 0
    %1724 = vmatpush1.bf16.msra.mxu0 0
    %1725 = vmatprep.subr.bf16.mxu0 0
    %1726 = vmatpush1.bf16.msra.mxu0 0
    %1727 = vmatprep.subr.bf16.mxu0 0
    %1728 = vmatpush1.bf16.msra.mxu0 0
    %1729 = vmatprep.subr.bf16.mxu0 0
    %1730 = vmatpush1.bf16.msra.mxu0 0
    %1731 = vmatprep.mubr.bf16.mxu0 0
    %1732 = vmatmul.mubr.bf16.gmra.mrb[0].mxu0 %v1657
    %v1733 = vpop.f32.mrb[0].mxu0
    %v1734 = vadd.f32 0.0, %v1733
    %v1735 = vpop.f32.mrb[0].mxu0
    %v1736 = vadd.f32 0.0, %v1735
    %v1737 = vpop.f32.mrb[0].mxu0
    %v1738 = vpop.f32.mrb[0].mxu0
    %1739 = vdwg.mxu0
    %v1740 = vadd.f32 %v1653, %v1693
    %v1741 = vadd.f32 %v1654, %v1695
    %v1742 = vadd.f32 %v1655, %v1734
    %v1743 = vadd.f32 %v1656, %v1736
    %v1744 = vxor.u32 %v1740, 2147483648
    %v1745 = vmul.f32 %v1744, 1.442695
    %v1746 = vpow.pop %v1745
    %v1747 = vadd.f32 %v1746, 1.0
    %v1748 = vrcp.pop %v1747
    %v1749 = vmul.f32 1.0, %v1748
    %v1750 = vxor.u32 %v1741, 2147483648
    %v1751 = vmul.f32 %v1750, 1.442695
    %v1752 = vpow.pop %v1751
    %v1753 = vadd.f32 %v1752, 1.0
    %v1754 = vrcp.pop %v1753
    %v1755 = vmul.f32 1.0, %v1754
    %v1756 = vtanh.pop %v1742
    %v1757 = vxor.u32 %v1743, 2147483648
    %v1758 = vmul.f32 %v1757, 1.442695
    %v1759 = vpow.pop %v1758
    %v1760 = vadd.f32 %v1759, 1.0
    %v1761 = vrcp.pop %v1760
    %v1762 = vmul.f32 1.0, %v1761
    %v1763 = vmul.f32 %v1755, %v1610
    %v1764 = vmul.f32 %v1749, %v1756
    %v1765 = vadd.f32 %v1763, %v1764
    %v1766 = vtanh.pop %v1765
    %v1767 = vmul.f32 %v1762, %v1766
    %v1768 = vmul.f32 %v1767, %v1616
    %v1769 = vsel %vm1618, %v1768, 0.0
    %1770 = vadd.xlane.f32.xlu0 %v1769
    %v1771 = vpop.xlane.xlu0 %1770
    %v1772 = vadd.f32 %v1771, %v1625
    %1774 = vset.pattern.permute.xlu0 0
    %1775 = vperm.xlu0 %1774, %v1772
    %v1776 = vpop.permute.xlu0 %1775
    %v1778 = vmul.f32 %v1776, %v286
    %v1779 = vmul.f32 %v1776, %v290
    %v1780 = vmul.f32 %v1776, %v294
    %v1781 = vmul.f32 %v1776, %v298
    %v1782 = vadd.f32 %v1778, %v314
    %v1783 = vadd.f32 %v1779, %v318
    %v1784 = vadd.f32 %v1780, %v322
    %v1785 = vadd.f32 %v1781, %v326
    %v1787 = vlaneseq
    %v1788 = vshrl.u32 %v1787, 7
    %v1789 = vsub.s32 0, %v1788
    %v1790 = vrot.slane %v387, %v1789
    %1791 = vset.pattern.permute.xlu0 0
    %1792 = vperm.xlu0 %1791, %v1790
    %v1793 = vpop.permute.xlu0 %1792
    %v1795 = vmul.f32 %v1793, %v1782
    %v1796 = vmul.f32 %v1793, %v1783
    %v1797 = vmul.f32 %v1793, %v1784
    %v1798 = vmul.f32 %v1793, %v1785
    %v1799 = vadd.f32 %v378, %v1795
    %v1800 = vadd.f32 %v379, %v1796
    %v1801 = vadd.f32 %v380, %v1797
    %v1802 = vadd.f32 %v381, %v1798
    %v1803 = vpack.c.bf16 %v1767, %v1767
    %1804 = vmatprep.subr.bf16.mxu0 %v1440
    %1805 = vmatpush1.bf16.msra.mxu0 %v1439
    %1806 = vmatprep.subr.bf16.mxu0 %v1444
    %1807 = vmatpush1.bf16.msra.mxu0 %v1443
    %1808 = vmatprep.subr.bf16.mxu0 %v1448
    %1809 = vmatpush1.bf16.msra.mxu0 %v1447
    %1810 = vmatprep.subr.bf16.mxu0 %v1452
    %1811 = vmatpush1.bf16.msra.mxu0 %v1451
    %1812 = vmatprep.subr.bf16.mxu0 %v1456
    %1813 = vmatpush1.bf16.msra.mxu0 %v1455
    %1814 = vmatprep.subr.bf16.mxu0 %v1460
    %1815 = vmatpush1.bf16.msra.mxu0 %v1459
    %1816 = vmatprep.subr.bf16.mxu0 %v1464
    %1817 = vmatpush1.bf16.msra.mxu0 %v1463
    %1818 = vmatprep.subr.bf16.mxu0 %v1468
    %1819 = vmatpush1.bf16.msra.mxu0 %v1467
    %1820 = vmatprep.subr.bf16.mxu0 0
    %1821 = vmatpush1.bf16.msra.mxu0 0
    %1822 = vmatprep.subr.bf16.mxu0 0
    %1823 = vmatpush1.bf16.msra.mxu0 0
    %1824 = vmatprep.subr.bf16.mxu0 0
    %1825 = vmatpush1.bf16.msra.mxu0 0
    %1826 = vmatprep.subr.bf16.mxu0 0
    %1827 = vmatpush1.bf16.msra.mxu0 0
    %1828 = vmatprep.subr.bf16.mxu0 0
    %1829 = vmatpush1.bf16.msra.mxu0 0
    %1830 = vmatprep.subr.bf16.mxu0 0
    %1831 = vmatpush1.bf16.msra.mxu0 0
    %1832 = vmatprep.subr.bf16.mxu0 0
    %1833 = vmatpush1.bf16.msra.mxu0 0
    %1834 = vmatprep.subr.bf16.mxu0 0
    %1835 = vmatpush1.bf16.msra.mxu0 0
    %1836 = vmatprep.mubr.bf16.mxu0 0
    %1837 = vmatmul.mubr.bf16.gmra.mrb[0].mxu0 %v1803
    %v1838 = vpop.f32.mrb[0].mxu0
    %v1839 = vadd.f32 0.0, %v1838
    %v1840 = vpop.f32.mrb[0].mxu0
    %v1841 = vadd.f32 0.0, %v1840
    %v1842 = vpop.f32.mrb[0].mxu0
    %v1843 = vpop.f32.mrb[0].mxu0
    %1844 = vdwg.mxu0
    %1845 = vmatprep.subr.bf16.mxu0 %v1442
    %1846 = vmatpush1.bf16.msra.mxu0 %v1441
    %1847 = vmatprep.subr.bf16.mxu0 %v1446
    %1848 = vmatpush1.bf16.msra.mxu0 %v1445
    %1849 = vmatprep.subr.bf16.mxu0 %v1450
    %1850 = vmatpush1.bf16.msra.mxu0 %v1449
    %1851 = vmatprep.subr.bf16.mxu0 %v1454
    %1852 = vmatpush1.bf16.msra.mxu0 %v1453
    %1853 = vmatprep.subr.bf16.mxu0 %v1458
    %1854 = vmatpush1.bf16.msra.mxu0 %v1457
    %1855 = vmatprep.subr.bf16.mxu0 %v1462
    %1856 = vmatpush1.bf16.msra.mxu0 %v1461
    %1857 = vmatprep.subr.bf16.mxu0 %v1466
    %1858 = vmatpush1.bf16.msra.mxu0 %v1465
    %1859 = vmatprep.subr.bf16.mxu0 %v1470
    %1860 = vmatpush1.bf16.msra.mxu0 %v1469
    %1861 = vmatprep.subr.bf16.mxu0 0
    %1862 = vmatpush1.bf16.msra.mxu0 0
    %1863 = vmatprep.subr.bf16.mxu0 0
    %1864 = vmatpush1.bf16.msra.mxu0 0
    %1865 = vmatprep.subr.bf16.mxu0 0
    %1866 = vmatpush1.bf16.msra.mxu0 0
    %1867 = vmatprep.subr.bf16.mxu0 0
    %1868 = vmatpush1.bf16.msra.mxu0 0
    %1869 = vmatprep.subr.bf16.mxu0 0
    %1870 = vmatpush1.bf16.msra.mxu0 0
    %1871 = vmatprep.subr.bf16.mxu0 0
    %1872 = vmatpush1.bf16.msra.mxu0 0
    %1873 = vmatprep.subr.bf16.mxu0 0
    %1874 = vmatpush1.bf16.msra.mxu0 0
    %1875 = vmatprep.subr.bf16.mxu0 0
    %1876 = vmatpush1.bf16.msra.mxu0 0
    %1877 = vmatprep.mubr.bf16.mxu0 0
    %1878 = vmatmul.mubr.bf16.gmra.mrb[0].mxu0 %v1803
    %v1879 = vpop.f32.mrb[0].mxu0
    %v1880 = vadd.f32 0.0, %v1879
    %v1881 = vpop.f32.mrb[0].mxu0
    %v1882 = vadd.f32 0.0, %v1881
    %v1883 = vpop.f32.mrb[0].mxu0
    %v1884 = vpop.f32.mrb[0].mxu0
    %1885 = vdwg.mxu0
    %v1886 = vadd.f32 %v1799, %v1839
    %v1887 = vadd.f32 %v1800, %v1841
    %v1888 = vadd.f32 %v1801, %v1880
    %v1889 = vadd.f32 %v1802, %v1882
    %v1890 = vxor.u32 %v1886, 2147483648
    %v1891 = vmul.f32 %v1890, 1.442695
    %v1892 = vpow.pop %v1891
    %v1893 = vadd.f32 %v1892, 1.0
    %v1894 = vrcp.pop %v1893
    %v1895 = vmul.f32 1.0, %v1894
    %v1896 = vxor.u32 %v1887, 2147483648
    %v1897 = vmul.f32 %v1896, 1.442695
    %v1898 = vpow.pop %v1897
    %v1899 = vadd.f32 %v1898, 1.0
    %v1900 = vrcp.pop %v1899
    %v1901 = vmul.f32 1.0, %v1900
    %v1902 = vtanh.pop %v1888
    %v1903 = vxor.u32 %v1889, 2147483648
    %v1904 = vmul.f32 %v1903, 1.442695
    %v1905 = vpow.pop %v1904
    %v1906 = vadd.f32 %v1905, 1.0
    %v1907 = vrcp.pop %v1906
    %v1908 = vmul.f32 1.0, %v1907
    %v1909 = vmul.f32 %v1901, %v1765
    %v1910 = vmul.f32 %v1895, %v1902
    %v1911 = vadd.f32 %v1909, %v1910
    %v1912 = vtanh.pop %v1911
    %v1913 = vmul.f32 %v1908, %v1912
    %v1914 = vmul.f32 %v1913, %v1616
    %v1915 = vsel %vm1618, %v1914, 0.0
    %1916 = vadd.xlane.f32.xlu0 %v1915
    %v1917 = vpop.xlane.xlu0 %1916
    %v1918 = vadd.f32 %v1917, %v1625
    %1920 = vset.pattern.permute.xlu0 0
    %1921 = vperm.xlu0 %1920, %v1918
    %v1922 = vpop.permute.xlu0 %1921
    %v1924 = vmul.f32 %v1922, %v286
    %v1925 = vmul.f32 %v1922, %v290
    %v1926 = vmul.f32 %v1922, %v294
    %v1927 = vmul.f32 %v1922, %v298
    %v1928 = vadd.f32 %v1924, %v314
    %v1929 = vadd.f32 %v1925, %v318
    %v1930 = vadd.f32 %v1926, %v322
    %v1931 = vadd.f32 %v1927, %v326
    %v1933 = vlaneseq
    %v1934 = vshrl.u32 %v1933, 7
    %v1935 = vsub.s32 0, %v1934
    %v1936 = vrot.slane %v388, %v1935
    %1937 = vset.pattern.permute.xlu0 0
    %1938 = vperm.xlu0 %1937, %v1936
    %v1939 = vpop.permute.xlu0 %1938
    %v1941 = vmul.f32 %v1939, %v1928
    %v1942 = vmul.f32 %v1939, %v1929
    %v1943 = vmul.f32 %v1939, %v1930
    %v1944 = vmul.f32 %v1939, %v1931
    %v1945 = vadd.f32 %v382, %v1941
    %v1946 = vadd.f32 %v383, %v1942
    %v1947 = vadd.f32 %v384, %v1943
    %v1948 = vadd.f32 %v385, %v1944
    %v1949 = vpack.c.bf16 %v1913, %v1913
    %1950 = vmatprep.subr.bf16.mxu0 %v1440
    %1951 = vmatpush1.bf16.msra.mxu0 %v1439
    %1952 = vmatprep.subr.bf16.mxu0 %v1444
    %1953 = vmatpush1.bf16.msra.mxu0 %v1443
    %1954 = vmatprep.subr.bf16.mxu0 %v1448
    %1955 = vmatpush1.bf16.msra.mxu0 %v1447
    %1956 = vmatprep.subr.bf16.mxu0 %v1452
    %1957 = vmatpush1.bf16.msra.mxu0 %v1451
    %1958 = vmatprep.subr.bf16.mxu0 %v1456
    %1959 = vmatpush1.bf16.msra.mxu0 %v1455
    %1960 = vmatprep.subr.bf16.mxu0 %v1460
    %1961 = vmatpush1.bf16.msra.mxu0 %v1459
    %1962 = vmatprep.subr.bf16.mxu0 %v1464
    %1963 = vmatpush1.bf16.msra.mxu0 %v1463
    %1964 = vmatprep.subr.bf16.mxu0 %v1468
    %1965 = vmatpush1.bf16.msra.mxu0 %v1467
    %1966 = vmatprep.subr.bf16.mxu0 0
    %1967 = vmatpush1.bf16.msra.mxu0 0
    %1968 = vmatprep.subr.bf16.mxu0 0
    %1969 = vmatpush1.bf16.msra.mxu0 0
    %1970 = vmatprep.subr.bf16.mxu0 0
    %1971 = vmatpush1.bf16.msra.mxu0 0
    %1972 = vmatprep.subr.bf16.mxu0 0
    %1973 = vmatpush1.bf16.msra.mxu0 0
    %1974 = vmatprep.subr.bf16.mxu0 0
    %1975 = vmatpush1.bf16.msra.mxu0 0
    %1976 = vmatprep.subr.bf16.mxu0 0
    %1977 = vmatpush1.bf16.msra.mxu0 0
    %1978 = vmatprep.subr.bf16.mxu0 0
    %1979 = vmatpush1.bf16.msra.mxu0 0
    %1980 = vmatprep.subr.bf16.mxu0 0
    %1981 = vmatpush1.bf16.msra.mxu0 0
    %1982 = vmatprep.mubr.bf16.mxu0 0
    %1983 = vmatmul.mubr.bf16.gmra.mrb[0].mxu0 %v1949
    %v1984 = vpop.f32.mrb[0].mxu0
    %v1985 = vadd.f32 0.0, %v1984
    %v1986 = vpop.f32.mrb[0].mxu0
    %v1987 = vadd.f32 0.0, %v1986
    %v1988 = vpop.f32.mrb[0].mxu0
    %v1989 = vpop.f32.mrb[0].mxu0
    %1990 = vdwg.mxu0
    %1991 = vmatprep.subr.bf16.mxu0 %v1442
    %1992 = vmatpush1.bf16.msra.mxu0 %v1441
    %1993 = vmatprep.subr.bf16.mxu0 %v1446
    %1994 = vmatpush1.bf16.msra.mxu0 %v1445
    %1995 = vmatprep.subr.bf16.mxu0 %v1450
    %1996 = vmatpush1.bf16.msra.mxu0 %v1449
    %1997 = vmatprep.subr.bf16.mxu0 %v1454
    %1998 = vmatpush1.bf16.msra.mxu0 %v1453
    %1999 = vmatprep.subr.bf16.mxu0 %v1458
    %2000 = vmatpush1.bf16.msra.mxu0 %v1457
    %2001 = vmatprep.subr.bf16.mxu0 %v1462
    %2002 = vmatpush1.bf16.msra.mxu0 %v1461
    %2003 = vmatprep.subr.bf16.mxu0 %v1466
    %2004 = vmatpush1.bf16.msra.mxu0 %v1465
    %2005 = vmatprep.subr.bf16.mxu0 %v1470
    %2006 = vmatpush1.bf16.msra.mxu0 %v1469
    %2007 = vmatprep.subr.bf16.mxu0 0
    %2008 = vmatpush1.bf16.msra.mxu0 0
    %2009 = vmatprep.subr.bf16.mxu0 0
    %2010 = vmatpush1.bf16.msra.mxu0 0
    %2011 = vmatprep.subr.bf16.mxu0 0
    %2012 = vmatpush1.bf16.msra.mxu0 0
    %2013 = vmatprep.subr.bf16.mxu0 0
    %2014 = vmatpush1.bf16.msra.mxu0 0
    %2015 = vmatprep.subr.bf16.mxu0 0
    %2016 = vmatpush1.bf16.msra.mxu0 0
    %2017 = vmatprep.subr.bf16.mxu0 0
    %2018 = vmatpush1.bf16.msra.mxu0 0
    %2019 = vmatprep.subr.bf16.mxu0 0
    %2020 = vmatpush1.bf16.msra.mxu0 0
    %2021 = vmatprep.subr.bf16.mxu0 0
    %2022 = vmatpush1.bf16.msra.mxu0 0
    %2023 = vmatprep.mubr.bf16.mxu0 0
    %2024 = vmatmul.mubr.bf16.gmra.mrb[0].mxu0 %v1949
    %v2025 = vpop.f32.mrb[0].mxu0
    %v2026 = vadd.f32 0.0, %v2025
    %v2027 = vpop.f32.mrb[0].mxu0
    %v2028 = vadd.f32 0.0, %v2027
    %v2029 = vpop.f32.mrb[0].mxu0
    %v2030 = vpop.f32.mrb[0].mxu0
    %2031 = vdwg.mxu0
    %v2032 = vadd.f32 %v1945, %v1985
    %v2033 = vadd.f32 %v1946, %v1987
    %v2034 = vadd.f32 %v1947, %v2026
    %v2035 = vadd.f32 %v1948, %v2028
    %v2036 = vxor.u32 %v2032, 2147483648
    %v2037 = vmul.f32 %v2036, 1.442695
    %v2038 = vpow.pop %v2037
    %v2039 = vadd.f32 %v2038, 1.0
    %v2040 = vrcp.pop %v2039
    %v2041 = vmul.f32 1.0, %v2040
    %v2042 = vxor.u32 %v2033, 2147483648
    %v2043 = vmul.f32 %v2042, 1.442695
    %v2044 = vpow.pop %v2043
    %v2045 = vadd.f32 %v2044, 1.0
    %v2046 = vrcp.pop %v2045
    %v2047 = vmul.f32 1.0, %v2046
    %v2048 = vtanh.pop %v2034
    %v2049 = vxor.u32 %v2035, 2147483648
    %v2050 = vmul.f32 %v2049, 1.442695
    %v2051 = vpow.pop %v2050
    %v2052 = vadd.f32 %v2051, 1.0
    %v2053 = vrcp.pop %v2052
    %v2054 = vmul.f32 1.0, %v2053
    %v2055 = vmul.f32 %v2047, %v1911
    %v2056 = vmul.f32 %v2041, %v2048
    %v2057 = vadd.f32 %v2055, %v2056
    %v2058 = vtanh.pop %v2057
    %v2059 = vmul.f32 %v2054, %v2058
    %v2060 = vmul.f32 %v2059, %v1616
    %v2061 = vsel %vm1618, %v2060, 0.0
    %2062 = vadd.xlane.f32.xlu0 %v2061
    %v2063 = vpop.xlane.xlu0 %2062
    %v2064 = vadd.f32 %v2063, %v1625
    %v2065 = vrot.slane %v1772, 6
    %v2067 = vrot.slane %v1918, 4
    %v2070 = vrot.slane %v2064, 2
    %v2072 = vsel %vm1618, %v1626, %v2065
    %vm2073 = vcmask 1043456
    %v2074 = vsel %vm2073, %v2072, %v2067
    %vm2075 = vcmask 1045504
    %v2076 = vsel %vm2075, %v2074, %v2070
    %vm2077 = vcmask 7168
    %2078 = vst.msk [vmem:[%s6] sm:$0xff] %vm2077, %v2076
    // Predicated region
    $region34: #{tpu_custom_call.1} parent=1 // pred_check
      _
    $region35: #{tpu_custom_call.1} parent=1 // pred_check_branch
      %2080 = sbr.rel (0) target = $region37
    $region36: #{tpu_custom_call.1} parent=1 // pred_region
      _
    $region37: #{tpu_custom_call.1} parent=1 // pred_fallthru
      _
    // Predicated region
    $region38: #{tpu_custom_call.1} parent=1 // pred_check
      _
    $region39: #{tpu_custom_call.1} parent=1 // pred_check_branch
      %2082 = sbr.rel (0) target = $region41
    $region40: #{tpu_custom_call.1} parent=1 // pred_region
      _
    $region41: #{tpu_custom_call.1} parent=1 // pred_fallthru
      _
    %2083 = vsyncpa [#allocation3], 1
    %2084 = vsyncpa [#allocation5], 1

</llo_original>
